<compile_context>
chip_gen: v7x
topology: tpu7x:2x2x1
jax: 0.10.0
libtpu: 0.0.40
codegen_flags: <defaults>
</compile_context>

<pallas_src>
import functools
import math

import jax
import jax.numpy as jnp
from jax.experimental import pallas as pl
from jax.experimental.pallas import tpu as pltpu


# ----------------------------------------------------------------------------
# Weight preprocessing helpers (plain JAX, weights only)
# ----------------------------------------------------------------------------
def conv_same_matrix(w, H, W):
    """Dense operator M such that x_flat @ M == conv2d(x, w, stride=1, 'same'),
    with x flattened NCHW row-major per example.  w: (Cout, Cin, kh, kw)."""
    Cout, Cin, kh, kw = w.shape
    ph, pw = kh // 2, kw // 2
    i = jnp.arange(H)
    j = jnp.arange(W)
    di = i[:, None] - i[None, :] + ph                       # (H, Ho) kernel row idx
    dj = j[:, None] - j[None, :] + pw                       # (W, Wo) kernel col idx
    valid = (((di >= 0) & (di < kh))[:, :, None, None]
             & ((dj >= 0) & (dj < kw))[None, None, :, :])   # (H, Ho, W, Wo)
    wm = w[:, :, jnp.clip(di, 0, kh - 1)[:, :, None, None],
           jnp.clip(dj, 0, kw - 1)[None, None, :, :]]        # (Cout,Cin,H,Ho,W,Wo)
    wm = wm * valid[None, None].astype(w.dtype)
    # rows index (cin, i, j), cols index (cout, p, q)
    return wm.transpose(1, 2, 4, 0, 3, 5).reshape(Cin * H * W, Cout * H * W)


def avgpool2_matrix(C, H, W):
    """Dense operator P such that x_flat @ P == 2x2 average pool (NCHW flatten)."""
    AH = (jnp.arange(H)[:, None] // 2 == jnp.arange(H // 2)[None, :]).astype(jnp.float32)
    AW = (jnp.arange(W)[:, None] // 2 == jnp.arange(W // 2)[None, :]).astype(jnp.float32)
    return jnp.kron(jnp.eye(C, dtype=jnp.float32), jnp.kron(AH, AW)) * 0.25


def prepare_params(params):
    """Once-per-weights preprocessing: fold channel structure, conv/pool
    operators (with pool->next-layer folding) into lane-dense bf16 operators
    and pack the tiny bias vectors into a single VMEM buffer."""
    f32, bf16 = jnp.float32, jnp.bfloat16
    gcn_ws = params["gcn_ws"]
    C = params["q"].shape[0]
    H = gcn_ws[0].shape[-1]
    CH = C * H
    in_dim = gcn_ws[0].shape[1]
    out_dim = params["wfc"].shape[1]
    n_layers = len(gcn_ws)

    eyeC = jnp.eye(C, dtype=f32)
    prep = {}

    # --- multi-channel GCN weights, channel-concatenated (lane-dense C*H) -----
    prep["w0cat"] = gcn_ws[0].transpose(1, 0, 2).reshape(in_dim, CH).astype(bf16)
    if n_layers > 1:
        prep["wbd"] = jnp.stack([
            (w[:, :, None, :] * eyeC[:, None, :, None]).reshape(CH, CH)
            for w in gcn_ws[1:]
        ]).astype(bf16)                                      # (L-1, CH, CH) block-diag

    # --- fc head (channel mean folded) + attention score projection, fused ----
    wfc_rep = jnp.tile(params["wfc"], (C, 1)) / float(C)     # (CH, out)
    d_kv = params["wk"].shape[1]
    kq = jnp.dot(params["wk"], params["q"].T) / math.sqrt(d_kv)      # (H, C)
    wkq = (kq.T[:, :, None] * eyeC[:, None, :]).reshape(CH, C)       # block layout
    prep["wfckq"] = jnp.concatenate([wfc_rep, wkq], axis=1).astype(bf16)  # (CH, out+C)
    prep["r_exp"] = jnp.kron(eyeC, jnp.ones((1, H), f32)).astype(bf16)    # (C, CH)

    # --- LeNet-style CNN head as dense operators, pools folded ----------------
    side = int(round(math.sqrt(H)))
    assert side * side == H, "gcn_h_dim must be a perfect square to form the CNN image"
    side2 = side // 2
    c1w, c1b = params["c1w"], params["c1b"]
    c2w, c2b = params["c2w"], params["c2b"]
    cout1, cout2 = c1w.shape[0], c2w.shape[0]
    M1 = conv_same_matrix(c1w, side, side)                   # (CH, cout1*side^2)
    P1 = avgpool2_matrix(cout1, side, side)
    M2 = conv_same_matrix(c2w, side2, side2)
    P2 = avgpool2_matrix(cout2, side2, side2)
    prep["m1"] = M1.astype(bf16)
    prep["m12"] = jnp.dot(P1, M2).astype(bf16)               # pool1 folded into conv2
    prep["pfc"] = jnp.dot(P2, params["fc2w"]).astype(bf16)   # pool2 folded into fc

    # --- packed bias buffer: rows = [bfc, conv1 bias, conv2 bias, fc bias] ----
    cw1 = cout1 * side * side
    cw2 = cout2 * side2 * side2
    pw = max(out_dim, cw1, cw2)
    pw = ((pw + 127) // 128) * 128
    pack = jnp.zeros((4, pw), f32)
    pack = pack.at[0, :out_dim].set(params["bfc"].reshape(-1))
    pack = pack.at[1, :cw1].set(jnp.repeat(c1b, side * side))
    pack = pack.at[2, :cw2].set(jnp.repeat(c2b, side2 * side2))
    pack = pack.at[3, :out_dim].set(params["fc2b"].reshape(-1))
    prep["bias"] = pack
    return prep


# ----------------------------------------------------------------------------
# The single fused Pallas kernel
# ----------------------------------------------------------------------------
def _mccd_kernel(*refs, n_layers):
    f32, bf16 = jnp.float32, jnp.bfloat16
    if n_layers > 1:
        (a_ref, x_ref, mask_ref, maskT_ref, w0_ref, wbd_ref, wfckq_ref, r_ref,
         m1_ref, m12_ref, pfc_ref, bias_ref, out_ref) = refs
    else:
        (a_ref, x_ref, mask_ref, maskT_ref, w0_ref, wfckq_ref, r_ref,
         m1_ref, m12_ref, pfc_ref, bias_ref, out_ref) = refs
        wbd_ref = None

    n_graphs = mask_ref.shape[0]
    n_ch = r_ref.shape[0]
    out_dim = out_ref.shape[1] // 2
    cw1 = m1_ref.shape[1]
    cw2 = m12_ref.shape[1]

    a_hat = a_ref[...]                                       # (N, N)  bf16
    maskf = mask_ref[...]                                    # (B, N)  f32
    maskb = maskf.astype(bf16)
    maskT = maskT_ref[...]                                   # (N, B)  f32

    # ---- multi-channel GCN stack (bf16 MXU, f32 accumulation) ---------------
    ax = jnp.dot(a_hat, x_ref[...], preferred_element_type=f32)      # (N, in)
    z = jnp.dot(ax.astype(bf16), w0_ref[...], preferred_element_type=f32)  # (N, CH)
    if n_layers > 1:
        z = jnp.maximum(z, 0.0)
    for l in range(n_layers - 1):                            # static unroll
        zc = jnp.dot(z.astype(bf16), wbd_ref[l], preferred_element_type=f32)
        z = jnp.dot(a_hat, zc.astype(bf16), preferred_element_type=f32)
        if l < n_layers - 2:
            z = jnp.maximum(z, 0.0)
    zb = z.astype(bf16)

    # ---- shared projection: [fc head | attention scores] in one matmul ------
    gs = jnp.dot(zb, wfckq_ref[...], preferred_element_type=f32)     # (N, out+C)
    g = gs[:, :out_dim] + bias_ref[0:1, 0:out_dim]                   # (N, out)
    s = gs[:, out_dim:out_dim + n_ch]                                # (N, C)

    # ---- head 1: channel-mean fc -> global mean pool -> log_softmax ---------
    cnt = jnp.sum(maskf, axis=1, keepdims=True)                      # (B, 1)
    pooled = (jnp.dot(maskb, g.astype(bf16), preferred_element_type=f32)
              * pl.reciprocal(jnp.maximum(cnt, 1.0), approx=True))   # (B, out)
    m1v = jnp.max(pooled, axis=-1, keepdims=True)
    lse1 = jnp.log(jnp.sum(jnp.exp(pooled - m1v), axis=-1, keepdims=True)) + m1v
    o1 = pooled - lse1

    # ---- EmbeddingTransform: per-channel attention pooling over nodes -------
    # per-graph softmax max (correctness fix): static loop over graphs, 2-D ops
    node_mx = jnp.zeros_like(s)
    for b in range(n_graphs):
        gate = maskT[:, b:b + 1]                             # (N, 1) 0/1 membership
        sb = s + (gate - 1.0) * 1e30                         # -inf-ish outside graph b
        mxb = jnp.max(sb, axis=0, keepdims=True)             # (1, C) graph-b max
        node_mx = node_mx + gate * mxb
    e = jnp.exp(jnp.minimum(s - node_mx, 0.0))               # (N, C) stabilized
    ew = jnp.dot(e.astype(bf16), r_ref[...], preferred_element_type=f32)     # (N, CH)
    num = jnp.dot(maskb, (z * ew).astype(bf16), preferred_element_type=f32)  # (B, CH)
    den_c = jnp.dot(maskb, e.astype(bf16), preferred_element_type=f32)       # (B, C)
    den = jnp.dot(den_c.astype(bf16), r_ref[...], preferred_element_type=f32)
    img = num * pl.reciprocal(jnp.maximum(den, 1e-6), approx=True)   # (B, CH) NCHW flat

    # ---- CNN head: conv1+relu -> (pool1*conv2)+relu -> (pool2*fc) -----------
    h = jnp.maximum(jnp.dot(img.astype(bf16), m1_ref[...], preferred_element_type=f32)
                    + bias_ref[1:2, 0:cw1], 0.0)
    h = jnp.maximum(jnp.dot(h.astype(bf16), m12_ref[...], preferred_element_type=f32)
                    + bias_ref[2:3, 0:cw2], 0.0)
    y = (jnp.dot(h.astype(bf16), pfc_ref[...], preferred_element_type=f32)
         + bias_ref[3:4, 0:out_dim])
    m2v = jnp.max(y, axis=-1, keepdims=True)
    lse2 = jnp.log(jnp.sum(jnp.exp(y - m2v), axis=-1, keepdims=True)) + m2v
    o2 = y - lse2

    out_ref[...] = jnp.concatenate([o1, o2], axis=-1)


# ----------------------------------------------------------------------------
# Forward wrapper (per-call work only: a_hat / mask construction + launch)
# ----------------------------------------------------------------------------
@functools.partial(jax.jit, static_argnums=(4,))
def mccd_forward(x, edge_index, batch, prep, num_graphs):
    N = x.shape[0]
    n_layers = prep["wbd"].shape[0] + 1 if "wbd" in prep else 1
    out_dim = prep["pfc"].shape[1]

    # GCN propagation matrix: symmetric adjacency, self-loop diagonal forced to 1.
    A = jnp.zeros((N, N), jnp.float32).at[edge_index[0], edge_index[1]].set(1.0)
    A = jnp.maximum(A, A.T)
    eyeN = jnp.eye(N, dtype=jnp.float32)
    A = A * (1.0 - eyeN) + eyeN
    dinv = 1.0 / jnp.sqrt(A.sum(axis=1))
    a_hat = (dinv[:, None] * A * dinv[None, :]).astype(jnp.bfloat16)

    # per-graph membership mask (global_mean_pool / per-graph attention)
    mask = (batch[None, :] == jnp.arange(num_graphs)[:, None]).astype(jnp.float32)
    maskT = mask.T

    inputs = [a_hat, x.astype(jnp.bfloat16), mask, maskT, prep["w0cat"]]
    if n_layers > 1:
        inputs.append(prep["wbd"])
    inputs += [prep["wfckq"], prep["r_exp"], prep["m1"], prep["m12"],
               prep["pfc"], prep["bias"]]

    vmem = lambda: pl.BlockSpec(memory_space=pltpu.MemorySpace.VMEM)
    out = pl.pallas_call(
        functools.partial(_mccd_kernel, n_layers=n_layers),
        out_shape=jax.ShapeDtypeStruct((num_graphs, 2 * out_dim), jnp.float32),
        in_specs=[vmem() for _ in inputs],
        out_specs=vmem(),
        compiler_params=pltpu.CompilerParams(vmem_limit_bytes=32 * 1024 * 1024),
    )(*inputs)
    return out[:, :out_dim], out[:, out_dim:]


# ----------------------------------------------------------------------------
# Driver
# ----------------------------------------------------------------------------
if __name__ == "__main__":
    key = jax.random.PRNGKey(0)
    keys = jax.random.split(key, 16)

    # net_params (small, consistent with the module)
    in_dim, gcn_h_dim, out_dim = 6, 64, 3      # gcn_h_dim -> 8x8 image per channel
    sz_c, gcn_nums, d_kv = 4, 2, 32
    N, B_graphs, E = 16, 2, 40

    # inputs: node features, edges, node->graph assignment
    x = jax.random.normal(keys[0], (N, in_dim), jnp.float32)
    edge_index = jax.random.randint(keys[1], (2, E), 0, N)
    batch = jnp.concatenate(
        [jnp.zeros(N // 2, jnp.int32), jnp.ones(N - N // 2, jnp.int32)]
    )

    # deterministic parameter init
    gcn_ws = [
        jax.random.normal(keys[2], (sz_c, in_dim, gcn_h_dim), jnp.float32)
        / math.sqrt(in_dim)
    ]
    for li in range(gcn_nums - 1):
        gcn_ws.append(
            jax.random.normal(keys[3 + li], (sz_c, gcn_h_dim, gcn_h_dim), jnp.float32)
            / math.sqrt(gcn_h_dim)
        )
    params = dict(
        gcn_ws=gcn_ws,
        wfc=jax.random.normal(keys[6], (gcn_h_dim, out_dim), jnp.float32)
        / math.sqrt(gcn_h_dim),
        bfc=jnp.zeros((1, out_dim), jnp.float32),
        wk=jax.random.normal(keys[7], (gcn_h_dim, d_kv), jnp.float32)
        / math.sqrt(gcn_h_dim),
        q=jax.random.normal(keys[8], (sz_c, d_kv), jnp.float32) / math.sqrt(d_kv),
        c1w=jax.random.normal(keys[9], (4, sz_c, 5, 5), jnp.float32) * 0.1,
        c1b=jnp.zeros((4,), jnp.float32),
        c2w=jax.random.normal(keys[10], (8, 4, 5, 5), jnp.float32) * 0.1,
        c2b=jnp.zeros((8,), jnp.float32),
        fc2w=jax.random.normal(keys[11], (8 * 2 * 2, out_dim), jnp.float32) * 0.1,
        fc2b=jnp.zeros((1, out_dim), jnp.float32),
    )

    # once-per-weights preprocessing (hoisted out of the per-call path)
    prep = prepare_params(params)

    out1, out = mccd_forward(x, edge_index, batch, prep, B_graphs)
    jax.block_until_ready((out1, out))
    assert out1.shape == (B_graphs, out_dim) and out.shape == (B_graphs, out_dim)
    assert bool(jnp.isfinite(out1).all()) and bool(jnp.isfinite(out).all())
    print("KERNEL_OK")
</pallas_src>

<mosaic_0001>
module attributes {stable_mosaic.version = 11 : i64} {
  func.func @_mccd_kernel(%arg0: memref<16x16xbf16, #tpu.memory_space<vmem>>, %arg1: memref<16x6xbf16, #tpu.memory_space<vmem>>, %arg2: memref<2x16xf32, #tpu.memory_space<vmem>>, %arg3: memref<16x2xf32, #tpu.memory_space<vmem>>, %arg4: memref<6x256xbf16, #tpu.memory_space<vmem>>, %arg5: memref<1x256x256xbf16, #tpu.memory_space<vmem>>, %arg6: memref<256x7xbf16, #tpu.memory_space<vmem>>, %arg7: memref<4x256xbf16, #tpu.memory_space<vmem>>, %arg8: memref<256x256xbf16, #tpu.memory_space<vmem>>, %arg9: memref<256x128xbf16, #tpu.memory_space<vmem>>, %arg10: memref<128x3xbf16, #tpu.memory_space<vmem>>, %arg11: memref<4x256xf32, #tpu.memory_space<vmem>>, %arg12: memref<2x6xf32, #tpu.memory_space<vmem>>) attributes {dimension_semantics = [], scalar_prefetch = 0 : i64, scratch_operands = 0 : i64, tpu.core_type = #tpu.core_type<tc>} {
    %c0 = arith.constant 0 : index
    %c0_0 = arith.constant 0 : index
    %0 = vector.load %arg0[%c0, %c0_0] : memref<16x16xbf16, #tpu.memory_space<vmem>>, vector<16x16xbf16>
    %c0_1 = arith.constant 0 : index
    %c0_2 = arith.constant 0 : index
    %1 = vector.load %arg2[%c0_1, %c0_2] : memref<2x16xf32, #tpu.memory_space<vmem>>, vector<2x16xf32>
    %2 = arith.truncf %1 : vector<2x16xf32> to vector<2x16xbf16>
    %c0_3 = arith.constant 0 : index
    %c0_4 = arith.constant 0 : index
    %3 = vector.load %arg3[%c0_3, %c0_4] : memref<16x2xf32, #tpu.memory_space<vmem>>, vector<16x2xf32>
    %c0_5 = arith.constant 0 : index
    %c0_6 = arith.constant 0 : index
    %4 = vector.load %arg1[%c0_5, %c0_6] : memref<16x6xbf16, #tpu.memory_space<vmem>>, vector<16x6xbf16>
    %cst = arith.constant dense<0.000000e+00> : vector<16x6xf32>
    %5 = tpu.matmul %0, %4, %cst {dimension_numbers = #tpu.dot_dimension_numbers<[1], [0], [0], [1], [0, 0, 1, 1], [], []>} : vector<16x16xbf16>, vector<16x6xbf16>, vector<16x6xf32> -> vector<16x6xf32>
    %6 = arith.truncf %5 : vector<16x6xf32> to vector<16x6xbf16>
    %c0_7 = arith.constant 0 : index
    %c0_8 = arith.constant 0 : index
    %7 = vector.load %arg4[%c0_7, %c0_8] : memref<6x256xbf16, #tpu.memory_space<vmem>>, vector<6x256xbf16>
    %cst_9 = arith.constant dense<0.000000e+00> : vector<16x256xf32>
    %8 = tpu.matmul %6, %7, %cst_9 {dimension_numbers = #tpu.dot_dimension_numbers<[1], [0], [0], [1], [0, 0, 1, 1], [], []>} : vector<16x6xbf16>, vector<6x256xbf16>, vector<16x256xf32> -> vector<16x256xf32>
    %cst_10 = arith.constant 0.000000e+00 : f32
    %9 = vector.broadcast %cst_10 : f32 to vector<16x256xf32>
    %10 = arith.maximumf %8, %9 : vector<16x256xf32>
    %11 = arith.truncf %10 : vector<16x256xf32> to vector<16x256xbf16>
    %c0_11 = arith.constant 0 : index
    %c0_12 = arith.constant 0 : index
    %c0_13 = arith.constant 0 : index
    %12 = vector.load %arg5[%c0_11, %c0_12, %c0_13] : memref<1x256x256xbf16, #tpu.memory_space<vmem>>, vector<1x256x256xbf16>
    %13 = vector.shape_cast %12 : vector<1x256x256xbf16> to vector<256x256xbf16>
    %cst_14 = arith.constant dense<0.000000e+00> : vector<16x256xf32>
    %14 = tpu.matmul %11, %13, %cst_14 {dimension_numbers = #tpu.dot_dimension_numbers<[1], [0], [0], [1], [0, 0, 1, 1], [], []>} : vector<16x256xbf16>, vector<256x256xbf16>, vector<16x256xf32> -> vector<16x256xf32>
    %15 = arith.truncf %14 : vector<16x256xf32> to vector<16x256xbf16>
    %cst_15 = arith.constant dense<0.000000e+00> : vector<16x256xf32>
    %16 = tpu.matmul %0, %15, %cst_15 {dimension_numbers = #tpu.dot_dimension_numbers<[1], [0], [0], [1], [0, 0, 1, 1], [], []>} : vector<16x16xbf16>, vector<16x256xbf16>, vector<16x256xf32> -> vector<16x256xf32>
    %17 = arith.truncf %16 : vector<16x256xf32> to vector<16x256xbf16>
    %c0_16 = arith.constant 0 : index
    %c0_17 = arith.constant 0 : index
    %18 = vector.load %arg6[%c0_16, %c0_17] : memref<256x7xbf16, #tpu.memory_space<vmem>>, vector<256x7xbf16>
    %cst_18 = arith.constant dense<0.000000e+00> : vector<16x7xf32>
    %19 = tpu.matmul %17, %18, %cst_18 {dimension_numbers = #tpu.dot_dimension_numbers<[1], [0], [0], [1], [0, 0, 1, 1], [], []>} : vector<16x256xbf16>, vector<256x7xbf16>, vector<16x7xf32> -> vector<16x7xf32>
    %20 = vector.extract_strided_slice %19 {offsets = [0, 0], sizes = [16, 3], strides = [1, 1]} : vector<16x7xf32> to vector<16x3xf32>
    %c0_19 = arith.constant 0 : index
    %c0_20 = arith.constant 0 : index
    %21 = vector.load %arg11[%c0_19, %c0_20] : memref<4x256xf32, #tpu.memory_space<vmem>>, vector<1x3xf32>
    %22 = vector.broadcast %21 : vector<1x3xf32> to vector<16x3xf32>
    %23 = arith.addf %20, %22 : vector<16x3xf32>
    %24 = vector.extract_strided_slice %19 {offsets = [0, 3], sizes = [16, 4], strides = [1, 1]} : vector<16x7xf32> to vector<16x4xf32>
    %cst_21 = arith.constant dense<0.000000e+00> : vector<2xf32>
    %25 = vector.multi_reduction <add>, %1, %cst_21 [1] : vector<2x16xf32> to vector<2xf32>
    %26 = vector.shape_cast %25 : vector<2xf32> to vector<2x1xf32>
    %27 = arith.truncf %23 : vector<16x3xf32> to vector<16x3xbf16>
    %cst_22 = arith.constant dense<0.000000e+00> : vector<2x3xf32>
    %28 = tpu.matmul %2, %27, %cst_22 {dimension_numbers = #tpu.dot_dimension_numbers<[1], [0], [0], [1], [0, 0, 1, 1], [], []>} : vector<2x16xbf16>, vector<16x3xbf16>, vector<2x3xf32> -> vector<2x3xf32>
    %cst_23 = arith.constant 1.000000e+00 : f32
    %29 = vector.broadcast %cst_23 : f32 to vector<2x1xf32>
    %30 = arith.maximumf %26, %29 : vector<2x1xf32>
    %31 = tpu.reciprocal %30 {approx = true} : vector<2x1xf32> -> vector<2x1xf32>
    %32 = vector.broadcast %31 : vector<2x1xf32> to vector<2x3xf32>
    %33 = arith.mulf %28, %32 : vector<2x3xf32>
    %cst_24 = arith.constant dense<0xFF800000> : vector<2xf32>
    %34 = vector.multi_reduction <maximumf>, %33, %cst_24 [1] : vector<2x3xf32> to vector<2xf32>
    %35 = vector.shape_cast %34 : vector<2xf32> to vector<2x1xf32>
    %36 = vector.broadcast %35 : vector<2x1xf32> to vector<2x3xf32>
    %37 = arith.subf %33, %36 : vector<2x3xf32>
    %38 = math.exp %37 : vector<2x3xf32>
    %cst_25 = arith.constant dense<0.000000e+00> : vector<2xf32>
    %39 = vector.multi_reduction <add>, %38, %cst_25 [1] : vector<2x3xf32> to vector<2xf32>
    %40 = vector.shape_cast %39 : vector<2xf32> to vector<2x1xf32>
    %41 = math.log %40 : vector<2x1xf32>
    %42 = arith.addf %41, %35 : vector<2x1xf32>
    %43 = vector.broadcast %42 : vector<2x1xf32> to vector<2x3xf32>
    %44 = arith.subf %33, %43 : vector<2x3xf32>
    %cst_26 = arith.constant 0.000000e+00 : f32
    %45 = vector.broadcast %cst_26 : f32 to vector<16x4xf32>
    %46 = vector.extract_strided_slice %3 {offsets = [0, 0], sizes = [16, 1], strides = [1, 1]} : vector<16x2xf32> to vector<16x1xf32>
    %cst_27 = arith.constant 1.000000e+00 : f32
    %47 = vector.broadcast %cst_27 : f32 to vector<16x1xf32>
    %48 = arith.subf %46, %47 : vector<16x1xf32>
    %cst_28 = arith.constant 1.000000e+30 : f32
    %49 = vector.broadcast %cst_28 : f32 to vector<16x1xf32>
    %50 = arith.mulf %48, %49 : vector<16x1xf32>
    %51 = vector.broadcast %50 : vector<16x1xf32> to vector<16x4xf32>
    %52 = arith.addf %24, %51 : vector<16x4xf32>
    %cst_29 = arith.constant dense<0xFF800000> : vector<4xf32>
    %53 = vector.multi_reduction <maximumf>, %52, %cst_29 [0] : vector<16x4xf32> to vector<4xf32>
    %54 = vector.shape_cast %53 : vector<4xf32> to vector<1x4xf32>
    %55 = vector.broadcast %46 : vector<16x1xf32> to vector<16x4xf32>
    %56 = vector.broadcast %54 : vector<1x4xf32> to vector<16x4xf32>
    %57 = arith.mulf %55, %56 : vector<16x4xf32>
    %58 = arith.addf %45, %57 : vector<16x4xf32>
    %59 = vector.extract_strided_slice %3 {offsets = [0, 1], sizes = [16, 1], strides = [1, 1]} : vector<16x2xf32> to vector<16x1xf32>
    %cst_30 = arith.constant 1.000000e+00 : f32
    %60 = vector.broadcast %cst_30 : f32 to vector<16x1xf32>
    %61 = arith.subf %59, %60 : vector<16x1xf32>
    %cst_31 = arith.constant 1.000000e+30 : f32
    %62 = vector.broadcast %cst_31 : f32 to vector<16x1xf32>
    %63 = arith.mulf %61, %62 : vector<16x1xf32>
    %64 = vector.broadcast %63 : vector<16x1xf32> to vector<16x4xf32>
    %65 = arith.addf %24, %64 : vector<16x4xf32>
    %cst_32 = arith.constant dense<0xFF800000> : vector<4xf32>
    %66 = vector.multi_reduction <maximumf>, %65, %cst_32 [0] : vector<16x4xf32> to vector<4xf32>
    %67 = vector.shape_cast %66 : vector<4xf32> to vector<1x4xf32>
    %68 = vector.broadcast %59 : vector<16x1xf32> to vector<16x4xf32>
    %69 = vector.broadcast %67 : vector<1x4xf32> to vector<16x4xf32>
    %70 = arith.mulf %68, %69 : vector<16x4xf32>
    %71 = arith.addf %58, %70 : vector<16x4xf32>
    %72 = arith.subf %24, %71 : vector<16x4xf32>
    %cst_33 = arith.constant 0.000000e+00 : f32
    %73 = vector.broadcast %cst_33 : f32 to vector<16x4xf32>
    %74 = arith.minimumf %72, %73 : vector<16x4xf32>
    %75 = math.exp %74 : vector<16x4xf32>
    %76 = arith.truncf %75 : vector<16x4xf32> to vector<16x4xbf16>
    %c0_34 = arith.constant 0 : index
    %c0_35 = arith.constant 0 : index
    %77 = vector.load %arg7[%c0_34, %c0_35] : memref<4x256xbf16, #tpu.memory_space<vmem>>, vector<4x256xbf16>
    %cst_36 = arith.constant dense<0.000000e+00> : vector<16x256xf32>
    %78 = tpu.matmul %76, %77, %cst_36 {dimension_numbers = #tpu.dot_dimension_numbers<[1], [0], [0], [1], [0, 0, 1, 1], [], []>} : vector<16x4xbf16>, vector<4x256xbf16>, vector<16x256xf32> -> vector<16x256xf32>
    %79 = arith.mulf %16, %78 : vector<16x256xf32>
    %80 = arith.truncf %79 : vector<16x256xf32> to vector<16x256xbf16>
    %cst_37 = arith.constant dense<0.000000e+00> : vector<2x256xf32>
    %81 = tpu.matmul %2, %80, %cst_37 {dimension_numbers = #tpu.dot_dimension_numbers<[1], [0], [0], [1], [0, 0, 1, 1], [], []>} : vector<2x16xbf16>, vector<16x256xbf16>, vector<2x256xf32> -> vector<2x256xf32>
    %82 = arith.truncf %75 : vector<16x4xf32> to vector<16x4xbf16>
    %cst_38 = arith.constant dense<0.000000e+00> : vector<2x4xf32>
    %83 = tpu.matmul %2, %82, %cst_38 {dimension_numbers = #tpu.dot_dimension_numbers<[1], [0], [0], [1], [0, 0, 1, 1], [], []>} : vector<2x16xbf16>, vector<16x4xbf16>, vector<2x4xf32> -> vector<2x4xf32>
    %84 = arith.truncf %83 : vector<2x4xf32> to vector<2x4xbf16>
    %c0_39 = arith.constant 0 : index
    %c0_40 = arith.constant 0 : index
    %85 = vector.load %arg7[%c0_39, %c0_40] : memref<4x256xbf16, #tpu.memory_space<vmem>>, vector<4x256xbf16>
    %cst_41 = arith.constant dense<0.000000e+00> : vector<2x256xf32>
    %86 = tpu.matmul %84, %85, %cst_41 {dimension_numbers = #tpu.dot_dimension_numbers<[1], [0], [0], [1], [0, 0, 1, 1], [], []>} : vector<2x4xbf16>, vector<4x256xbf16>, vector<2x256xf32> -> vector<2x256xf32>
    %cst_42 = arith.constant 9.99999997E-7 : f32
    %87 = vector.broadcast %cst_42 : f32 to vector<2x256xf32>
    %88 = arith.maximumf %86, %87 : vector<2x256xf32>
    %89 = tpu.reciprocal %88 {approx = true} : vector<2x256xf32> -> vector<2x256xf32>
    %90 = arith.mulf %81, %89 : vector<2x256xf32>
    %91 = arith.truncf %90 : vector<2x256xf32> to vector<2x256xbf16>
    %c0_43 = arith.constant 0 : index
    %c0_44 = arith.constant 0 : index
    %92 = vector.load %arg8[%c0_43, %c0_44] : memref<256x256xbf16, #tpu.memory_space<vmem>>, vector<256x256xbf16>
    %cst_45 = arith.constant dense<0.000000e+00> : vector<2x256xf32>
    %93 = tpu.matmul %91, %92, %cst_45 {dimension_numbers = #tpu.dot_dimension_numbers<[1], [0], [0], [1], [0, 0, 1, 1], [], []>} : vector<2x256xbf16>, vector<256x256xbf16>, vector<2x256xf32> -> vector<2x256xf32>
    %c1 = arith.constant 1 : index
    %c0_46 = arith.constant 0 : index
    %94 = vector.load %arg11[%c1, %c0_46] : memref<4x256xf32, #tpu.memory_space<vmem>>, vector<1x256xf32>
    %95 = vector.broadcast %94 : vector<1x256xf32> to vector<2x256xf32>
    %96 = arith.addf %93, %95 : vector<2x256xf32>
    %cst_47 = arith.constant 0.000000e+00 : f32
    %97 = vector.broadcast %cst_47 : f32 to vector<2x256xf32>
    %98 = arith.maximumf %96, %97 : vector<2x256xf32>
    %99 = arith.truncf %98 : vector<2x256xf32> to vector<2x256xbf16>
    %c0_48 = arith.constant 0 : index
    %c0_49 = arith.constant 0 : index
    %100 = vector.load %arg9[%c0_48, %c0_49] : memref<256x128xbf16, #tpu.memory_space<vmem>>, vector<256x128xbf16>
    %cst_50 = arith.constant dense<0.000000e+00> : vector<2x128xf32>
    %101 = tpu.matmul %99, %100, %cst_50 {dimension_numbers = #tpu.dot_dimension_numbers<[1], [0], [0], [1], [0, 0, 1, 1], [], []>} : vector<2x256xbf16>, vector<256x128xbf16>, vector<2x128xf32> -> vector<2x128xf32>
    %c2 = arith.constant 2 : index
    %c0_51 = arith.constant 0 : index
    %102 = vector.load %arg11[%c2, %c0_51] : memref<4x256xf32, #tpu.memory_space<vmem>>, vector<1x128xf32>
    %103 = vector.broadcast %102 : vector<1x128xf32> to vector<2x128xf32>
    %104 = arith.addf %101, %103 : vector<2x128xf32>
    %cst_52 = arith.constant 0.000000e+00 : f32
    %105 = vector.broadcast %cst_52 : f32 to vector<2x128xf32>
    %106 = arith.maximumf %104, %105 : vector<2x128xf32>
    %107 = arith.truncf %106 : vector<2x128xf32> to vector<2x128xbf16>
    %c0_53 = arith.constant 0 : index
    %c0_54 = arith.constant 0 : index
    %108 = vector.load %arg10[%c0_53, %c0_54] : memref<128x3xbf16, #tpu.memory_space<vmem>>, vector<128x3xbf16>
    %cst_55 = arith.constant dense<0.000000e+00> : vector<2x3xf32>
    %109 = tpu.matmul %107, %108, %cst_55 {dimension_numbers = #tpu.dot_dimension_numbers<[1], [0], [0], [1], [0, 0, 1, 1], [], []>} : vector<2x128xbf16>, vector<128x3xbf16>, vector<2x3xf32> -> vector<2x3xf32>
    %c3 = arith.constant 3 : index
    %c0_56 = arith.constant 0 : index
    %110 = vector.load %arg11[%c3, %c0_56] : memref<4x256xf32, #tpu.memory_space<vmem>>, vector<1x3xf32>
    %111 = vector.broadcast %110 : vector<1x3xf32> to vector<2x3xf32>
    %112 = arith.addf %109, %111 : vector<2x3xf32>
    %cst_57 = arith.constant dense<0xFF800000> : vector<2xf32>
    %113 = vector.multi_reduction <maximumf>, %112, %cst_57 [1] : vector<2x3xf32> to vector<2xf32>
    %114 = vector.shape_cast %113 : vector<2xf32> to vector<2x1xf32>
    %115 = vector.broadcast %114 : vector<2x1xf32> to vector<2x3xf32>
    %116 = arith.subf %112, %115 : vector<2x3xf32>
    %117 = math.exp %116 : vector<2x3xf32>
    %cst_58 = arith.constant dense<0.000000e+00> : vector<2xf32>
    %118 = vector.multi_reduction <add>, %117, %cst_58 [1] : vector<2x3xf32> to vector<2xf32>
    %119 = vector.shape_cast %118 : vector<2xf32> to vector<2x1xf32>
    %120 = math.log %119 : vector<2x1xf32>
    %121 = arith.addf %120, %114 : vector<2x1xf32>
    %122 = vector.broadcast %121 : vector<2x1xf32> to vector<2x3xf32>
    %123 = arith.subf %112, %122 : vector<2x3xf32>
    %124 = tpu.concatenate %44, %123 in 1 : vector<2x3xf32>, vector<2x3xf32> -> vector<2x6xf32>
    %c0_59 = arith.constant 0 : index
    %c0_60 = arith.constant 0 : index
    %125 = vector.load %arg12[%c0_59, %c0_60] : memref<2x6xf32, #tpu.memory_space<vmem>>, vector<2x6xf32>
    tpu.vector_store %arg12[%c0_59, %c0_60], %124 {strides = array<i32>} : memref<2x6xf32, #tpu.memory_space<vmem>>, vector<2x6xf32>,
    return
  }
}

</mosaic_0001>

<llo_original>
// kernel: mccd_forward.1
$region0: #{mccd_forward.1}
  #allocation0 [shape = 'u32[]', space=smem, size = 0x4, offset = 0x4, fixed_abs, tag = 'smem constant byte address 0x4 - core index']
  #allocation1 [shape = 'u32[144,128]{1,0:T(1,128)}', space=vmem, size = 0x12000, scoped, tag = 'internal scratch']
  %s0 = inlined_call_operand.vmem [shape: bf16[16,16], index: 0, kind: input, shape index: {}]
  %s1 = inlined_call_operand.vmem [shape: bf16[16,6], index: 1, kind: input, shape index: {}]
  %s2 = inlined_call_operand.vmem [shape: f32[2,16], index: 2, kind: input, shape index: {}]
  %s3 = inlined_call_operand.vmem [shape: f32[16,2], index: 3, kind: input, shape index: {}]
  %s4 = inlined_call_operand.vmem [shape: bf16[6,256], index: 4, kind: input, shape index: {}]
  %s5 = inlined_call_operand.vmem [shape: bf16[1,256,256], index: 5, kind: input, shape index: {}]
  %s6 = inlined_call_operand.vmem [shape: bf16[256,7], index: 6, kind: input, shape index: {}]
  %s7 = inlined_call_operand.vmem [shape: bf16[4,256], index: 7, kind: input, shape index: {}]
  %s8 = inlined_call_operand.vmem [shape: bf16[256,256], index: 8, kind: input, shape index: {}]
  %s9 = inlined_call_operand.vmem [shape: bf16[256,128], index: 9, kind: input, shape index: {}]
  %s10 = inlined_call_operand.vmem [shape: bf16[128,3], index: 10, kind: input, shape index: {}]
  %s11 = inlined_call_operand.vmem [shape: f32[4,256], index: 11, kind: input, shape index: {}]
  %s12 = inlined_call_operand.vmem [shape: f32[2,6], index: 12, kind: output, shape index: {}]
  %s13 = sld [smem:[#allocation0]]
  $region58: #{mccd_forward.1} parent=0
    _
  %s15 = ssub.s32 1, %s13
  %s16 = scalar_select 0, %s15, %s13
  // Predicated region
  $region2: #{mccd_forward.1} parent=0 // pred_check
    _
  $region3: #{mccd_forward.1} parent=0 // pred_check_branch
    %18 = sbr.rel (0) target = $region5
  $region4: #{mccd_forward.1} parent=0 // pred_region
    _
  $region5: #{mccd_forward.1} parent=0 // pred_fallthru
    _
  // Predicated region
  $region6: #{mccd_forward.1} parent=0 // pred_check
    _
  $region7: #{mccd_forward.1} parent=0 // pred_check_branch
    %20 = sbr.rel (0) target = $region9
  $region8: #{mccd_forward.1} parent=0 // pred_region
    _
  $region9: #{mccd_forward.1} parent=0 // pred_fallthru
    _
  // Predicated region
  $region10: #{mccd_forward.1} parent=0 // pred_check
    _
  $region11: #{mccd_forward.1} parent=0 // pred_check_branch
    %22 = sbr.rel (0) target = $region13
  $region12: #{mccd_forward.1} parent=0 // pred_region
    _
  $region13: #{mccd_forward.1} parent=0 // pred_fallthru
    _
  // Predicated region
  $region14: #{mccd_forward.1} parent=0 // pred_check
    _
  $region15: #{mccd_forward.1} parent=0 // pred_check_branch
    %24 = sbr.rel (0) target = $region17
  $region16: #{mccd_forward.1} parent=0 // pred_region
    _
  $region17: #{mccd_forward.1} parent=0 // pred_fallthru
    _
  // Predicated region
  $region18: #{mccd_forward.1} parent=0 // pred_check
    _
  $region19: #{mccd_forward.1} parent=0 // pred_check_branch
    %26 = sbr.rel (0) target = $region21
  $region20: #{mccd_forward.1} parent=0 // pred_region
    _
  $region21: #{mccd_forward.1} parent=0 // pred_fallthru
    _
  // Predicated region
  $region22: #{mccd_forward.1} parent=0 // pred_check
    _
  $region23: #{mccd_forward.1} parent=0 // pred_check_branch
    %28 = sbr.rel (0) target = $region25
  $region24: #{mccd_forward.1} parent=0 // pred_region
    _
  $region25: #{mccd_forward.1} parent=0 // pred_fallthru
    _
  // Predicated region
  $region26: #{mccd_forward.1} parent=0 // pred_check
    _
  $region27: #{mccd_forward.1} parent=0 // pred_check_branch
    %30 = sbr.rel (0) target = $region29
  $region28: #{mccd_forward.1} parent=0 // pred_region
    _
  $region29: #{mccd_forward.1} parent=0 // pred_fallthru
    _
  // Predicated region
  $region30: #{mccd_forward.1} parent=0 // pred_check
    _
  $region31: #{mccd_forward.1} parent=0 // pred_check_branch
    %32 = sbr.rel (0) target = $region33
  $region32: #{mccd_forward.1} parent=0 // pred_region
    _
  $region33: #{mccd_forward.1} parent=0 // pred_fallthru
    _
  // Predicated region
  $region34: #{mccd_forward.1} parent=0 // pred_check
    _
  $region35: #{mccd_forward.1} parent=0 // pred_check_branch
    %34 = sbr.rel (0) target = $region37
  $region36: #{mccd_forward.1} parent=0 // pred_region
    _
  $region37: #{mccd_forward.1} parent=0 // pred_fallthru
    _
  // Predicated region
  $region38: #{mccd_forward.1} parent=0 // pred_check
    _
  $region39: #{mccd_forward.1} parent=0 // pred_check_branch
    %36 = sbr.rel (0) target = $region41
  $region40: #{mccd_forward.1} parent=0 // pred_region
    _
  $region41: #{mccd_forward.1} parent=0 // pred_fallthru
    _
  // Predicated region
  $region42: #{mccd_forward.1} parent=0 // pred_check
    _
  $region43: #{mccd_forward.1} parent=0 // pred_check_branch
    %38 = sbr.rel (0) target = $region45
  $region44: #{mccd_forward.1} parent=0 // pred_region
    _
  $region45: #{mccd_forward.1} parent=0 // pred_fallthru
    _
  // Predicated region
  $region46: #{mccd_forward.1} parent=0 // pred_check
    _
  $region47: #{mccd_forward.1} parent=0 // pred_check_branch
    %40 = sbr.rel (0) target = $region49
  $region48: #{mccd_forward.1} parent=0 // pred_region
    _
  $region49: #{mccd_forward.1} parent=0 // pred_fallthru
    _
  %v42 = vld [vmem:[%s0] sm:$0xf]
  %v43 = vld [vmem:[%s0 + $0x4] sm:$0xf]
  %v44 = vld [vmem:[%s2] sm:$0x3]
  %v45 = vpack.c.bf16 %v44, %v44
  %v46 = vld [vmem:[%s3] sm:$0xff]
  %v47 = vld [vmem:[%s3 + $0x8] sm:$0xff]
  %v48 = vld [vmem:[%s1] sm:$0xf]
  %v49 = vld [vmem:[%s1 + $0x4] sm:$0xf]
  %v52 = vunpack.c.l.b16 %v42
  %v53 = vunpack.c.l.b16 %v43
  %v54 = vpack.c.b16 %v53, %v52
  %v57 = vunpack.c.l.b16 %v48
  %v58 = vunpack.c.l.b16 %v49
  %v59 = vpack.c.b16 %v58, %v57
  %vm61 = vcmask 130048
  %v63 = vsel %vm61, %v54, 0
  %65 = vmatprep.subr.bf16.mxu0 0
  %66 = vmatpush1.bf16.msra.mxu0 %v59
  %67 = vmatprep.subr.bf16.mxu0 0
  %68 = vmatpush1.bf16.msra.mxu0 0
  %69 = vmatprep.subr.bf16.mxu0 0
  %70 = vmatpush1.bf16.msra.mxu0 0
  %71 = vmatprep.subr.bf16.mxu0 0
  %72 = vmatpush1.bf16.msra.mxu0 0
  %73 = vmatprep.subr.bf16.mxu0 0
  %74 = vmatpush1.bf16.msra.mxu0 0
  %75 = vmatprep.subr.bf16.mxu0 0
  %76 = vmatpush1.bf16.msra.mxu0 0
  %77 = vmatprep.subr.bf16.mxu0 0
  %78 = vmatpush1.bf16.msra.mxu0 0
  %79 = vmatprep.subr.bf16.mxu0 0
  %80 = vmatpush1.bf16.msra.mxu0 0
  %81 = vmatprep.subr.bf16.mxu0 0
  %82 = vmatpush1.bf16.msra.mxu0 0
  %83 = vmatprep.subr.bf16.mxu0 0
  %84 = vmatpush1.bf16.msra.mxu0 0
  %85 = vmatprep.subr.bf16.mxu0 0
  %86 = vmatpush1.bf16.msra.mxu0 0
  %87 = vmatprep.subr.bf16.mxu0 0
  %88 = vmatpush1.bf16.msra.mxu0 0
  %89 = vmatprep.subr.bf16.mxu0 0
  %90 = vmatpush1.bf16.msra.mxu0 0
  %91 = vmatprep.subr.bf16.mxu0 0
  %92 = vmatpush1.bf16.msra.mxu0 0
  %93 = vmatprep.subr.bf16.mxu0 0
  %94 = vmatpush1.bf16.msra.mxu0 0
  %95 = vmatprep.subr.bf16.mxu0 0
  %96 = vmatpush1.bf16.msra.mxu0 0
  %97 = vmatprep.mubr.bf16.mxu0 0
  %98 = vmatmul.mubr.bf16.gmra.mrb[0].mxu0 %v63
  %v99 = vpop.f32.mrb[0].mxu0
  %v100 = vadd.f32 0.0, %v99
  %v101 = vpop.f32.mrb[0].mxu0
  %v102 = vpop.f32.mrb[0].mxu0
  %v103 = vadd.f32 0.0, %v102
  %v104 = vpop.f32.mrb[0].mxu0
  %105 = vdwg.mxu0
  %v106 = vpack.c.bf16 %v103, %v100
  %v107 = vld [vmem:[%s4] sm:$0x77]
  %v109 = vunpack.c.l.b16 %v107
  %v110 = vunpack.c.h.b16 %v107
  %v111 = vpack.c.b16 %v109, %v109
  %v112 = vpack.c.b16 %v110, %v110
  %vm113 = vcmask 48128
  %v115 = vsel %vm113, %v106, 0
  %vm117 = vcmask 1042432
  %v119 = vsel %vm117, %v111, 0
  %v122 = vsel %vm117, %v112, 0
  %124 = vmatprep.subr.bf16.mxu0 %v122
  %125 = vmatpush1.bf16.msra.mxu0 %v119
  %126 = vmatprep.subr.bf16.mxu0 0
  %127 = vmatpush1.bf16.msra.mxu0 0
  %128 = vmatprep.subr.bf16.mxu0 0
  %129 = vmatpush1.bf16.msra.mxu0 0
  %130 = vmatprep.subr.bf16.mxu0 0
  %131 = vmatpush1.bf16.msra.mxu0 0
  %132 = vmatprep.subr.bf16.mxu0 0
  %133 = vmatpush1.bf16.msra.mxu0 0
  %134 = vmatprep.subr.bf16.mxu0 0
  %135 = vmatpush1.bf16.msra.mxu0 0
  %136 = vmatprep.subr.bf16.mxu0 0
  %137 = vmatpush1.bf16.msra.mxu0 0
  %138 = vmatprep.subr.bf16.mxu0 0
  %139 = vmatpush1.bf16.msra.mxu0 0
  %140 = vmatprep.subr.bf16.mxu0 0
  %141 = vmatpush1.bf16.msra.mxu0 0
  %142 = vmatprep.subr.bf16.mxu0 0
  %143 = vmatpush1.bf16.msra.mxu0 0
  %144 = vmatprep.subr.bf16.mxu0 0
  %145 = vmatpush1.bf16.msra.mxu0 0
  %146 = vmatprep.subr.bf16.mxu0 0
  %147 = vmatpush1.bf16.msra.mxu0 0
  %148 = vmatprep.subr.bf16.mxu0 0
  %149 = vmatpush1.bf16.msra.mxu0 0
  %150 = vmatprep.subr.bf16.mxu0 0
  %151 = vmatpush1.bf16.msra.mxu0 0
  %152 = vmatprep.subr.bf16.mxu0 0
  %153 = vmatpush1.bf16.msra.mxu0 0
  %154 = vmatprep.subr.bf16.mxu0 0
  %155 = vmatpush1.bf16.msra.mxu0 0
  %156 = vmatprep.mubr.bf16.mxu0 0
  %157 = vmatmul.mubr.bf16.gmra.mrb[0].mxu0 %v115
  %v158 = vpop.f32.mrb[0].mxu0
  %v159 = vadd.f32 0.0, %v158
  %v160 = vpop.f32.mrb[0].mxu0
  %v161 = vadd.f32 0.0, %v160
  %v162 = vpop.f32.mrb[0].mxu0
  %v163 = vadd.f32 0.0, %v162
  %v164 = vpop.f32.mrb[0].mxu0
  %v165 = vadd.f32 0.0, %v164
  %166 = vdwg.mxu0
  %v167 = vmax.f32 %v159, 0.0
  %v168 = vmax.f32 %v161, 0.0
  %v169 = vmax.f32 %v163, 0.0
  %v170 = vmax.f32 %v165, 0.0
  %v171 = vpack.c.bf16 %v169, %v167
  %v172 = vpack.c.bf16 %v170, %v168
  %v173 = vld [vmem:[%s5] sm:$0xff]
  %v174 = vld [vmem:[%s5 + $0x8] sm:$0xff]
  %v175 = vld [vmem:[%s5 + $0x10] sm:$0xff]
  %v176 = vld [vmem:[%s5 + $0x18] sm:$0xff]
  %v177 = vld [vmem:[%s5 + $0x20] sm:$0xff]
  %v178 = vld [vmem:[%s5 + $0x28] sm:$0xff]
  %v179 = vld [vmem:[%s5 + $0x30] sm:$0xff]
  %v180 = vld [vmem:[%s5 + $0x38] sm:$0xff]
  %v181 = vld [vmem:[%s5 + $0x40] sm:$0xff]
  %v182 = vld [vmem:[%s5 + $0x48] sm:$0xff]
  %v183 = vld [vmem:[%s5 + $0x50] sm:$0xff]
  %v184 = vld [vmem:[%s5 + $0x58] sm:$0xff]
  %v185 = vld [vmem:[%s5 + $0x60] sm:$0xff]
  %v186 = vld [vmem:[%s5 + $0x68] sm:$0xff]
  %v187 = vld [vmem:[%s5 + $0x70] sm:$0xff]
  %v188 = vld [vmem:[%s5 + $0x78] sm:$0xff]
  %v189 = vld [vmem:[%s5 + $0x80] sm:$0xff]
  %v190 = vld [vmem:[%s5 + $0x88] sm:$0xff]
  %v191 = vld [vmem:[%s5 + $0x90] sm:$0xff]
  %v192 = vld [vmem:[%s5 + $0x98] sm:$0xff]
  %v193 = vld [vmem:[%s5 + $0xa0] sm:$0xff]
  %v194 = vld [vmem:[%s5 + $0xa8] sm:$0xff]
  %v195 = vld [vmem:[%s5 + $0xb0] sm:$0xff]
  %v196 = vld [vmem:[%s5 + $0xb8] sm:$0xff]
  %v197 = vld [vmem:[%s5 + $0xc0] sm:$0xff]
  %v198 = vld [vmem:[%s5 + $0xc8] sm:$0xff]
  %v199 = vld [vmem:[%s5 + $0xd0] sm:$0xff]
  %v200 = vld [vmem:[%s5 + $0xd8] sm:$0xff]
  %v201 = vld [vmem:[%s5 + $0xe0] sm:$0xff]
  %v202 = vld [vmem:[%s5 + $0xe8] sm:$0xff]
  %v203 = vld [vmem:[%s5 + $0xf0] sm:$0xff]
  %v204 = vld [vmem:[%s5 + $0xf8] sm:$0xff]
  %v237 = vunpack.c.l.b16 %v173
  %v238 = vunpack.c.h.b16 %v173
  %v239 = vunpack.c.l.b16 %v174
  %v240 = vunpack.c.h.b16 %v174
  %v241 = vunpack.c.l.b16 %v175
  %v242 = vunpack.c.h.b16 %v175
  %v243 = vunpack.c.l.b16 %v176
  %v244 = vunpack.c.h.b16 %v176
  %v245 = vunpack.c.l.b16 %v177
  %v246 = vunpack.c.h.b16 %v177
  %v247 = vunpack.c.l.b16 %v178
  %v248 = vunpack.c.h.b16 %v178
  %v249 = vunpack.c.l.b16 %v179
  %v250 = vunpack.c.h.b16 %v179
  %v251 = vunpack.c.l.b16 %v180
  %v252 = vunpack.c.h.b16 %v180
  %v253 = vunpack.c.l.b16 %v181
  %v254 = vunpack.c.h.b16 %v181
  %v255 = vunpack.c.l.b16 %v182
  %v256 = vunpack.c.h.b16 %v182
  %v257 = vunpack.c.l.b16 %v183
  %v258 = vunpack.c.h.b16 %v183
  %v259 = vunpack.c.l.b16 %v184
  %v260 = vunpack.c.h.b16 %v184
  %v261 = vunpack.c.l.b16 %v185
  %v262 = vunpack.c.h.b16 %v185
  %v263 = vunpack.c.l.b16 %v186
  %v264 = vunpack.c.h.b16 %v186
  %v265 = vunpack.c.l.b16 %v187
  %v266 = vunpack.c.h.b16 %v187
  %v267 = vunpack.c.l.b16 %v188
  %v268 = vunpack.c.h.b16 %v188
  %v269 = vunpack.c.l.b16 %v189
  %v270 = vunpack.c.h.b16 %v189
  %v271 = vunpack.c.l.b16 %v190
  %v272 = vunpack.c.h.b16 %v190
  %v273 = vunpack.c.l.b16 %v191
  %v274 = vunpack.c.h.b16 %v191
  %v275 = vunpack.c.l.b16 %v192
  %v276 = vunpack.c.h.b16 %v192
  %v277 = vunpack.c.l.b16 %v193
  %v278 = vunpack.c.h.b16 %v193
  %v279 = vunpack.c.l.b16 %v194
  %v280 = vunpack.c.h.b16 %v194
  %v281 = vunpack.c.l.b16 %v195
  %v282 = vunpack.c.h.b16 %v195
  %v283 = vunpack.c.l.b16 %v196
  %v284 = vunpack.c.h.b16 %v196
  %v285 = vunpack.c.l.b16 %v197
  %v286 = vunpack.c.h.b16 %v197
  %v287 = vunpack.c.l.b16 %v198
  %v288 = vunpack.c.h.b16 %v198
  %v289 = vunpack.c.l.b16 %v199
  %v290 = vunpack.c.h.b16 %v199
  %v291 = vunpack.c.l.b16 %v200
  %v292 = vunpack.c.h.b16 %v200
  %v293 = vunpack.c.l.b16 %v201
  %v294 = vunpack.c.h.b16 %v201
  %v295 = vunpack.c.l.b16 %v202
  %v296 = vunpack.c.h.b16 %v202
  %v297 = vunpack.c.l.b16 %v203
  %v298 = vunpack.c.h.b16 %v203
  %v299 = vunpack.c.l.b16 %v204
  %v300 = vunpack.c.h.b16 %v204
  %v301 = vpack.c.b16 %v239, %v237
  %v302 = vpack.c.b16 %v240, %v238
  %v303 = vpack.c.b16 %v243, %v241
  %v304 = vpack.c.b16 %v244, %v242
  %v305 = vpack.c.b16 %v247, %v245
  %v306 = vpack.c.b16 %v248, %v246
  %v307 = vpack.c.b16 %v251, %v249
  %v308 = vpack.c.b16 %v252, %v250
  %v309 = vpack.c.b16 %v255, %v253
  %v310 = vpack.c.b16 %v256, %v254
  %v311 = vpack.c.b16 %v259, %v257
  %v312 = vpack.c.b16 %v260, %v258
  %v313 = vpack.c.b16 %v263, %v261
  %v314 = vpack.c.b16 %v264, %v262
  %v315 = vpack.c.b16 %v267, %v265
  %v316 = vpack.c.b16 %v268, %v266
  %v317 = vpack.c.b16 %v271, %v269
  %v318 = vpack.c.b16 %v272, %v270
  %v319 = vpack.c.b16 %v275, %v273
  %v320 = vpack.c.b16 %v276, %v274
  %v321 = vpack.c.b16 %v279, %v277
  %v322 = vpack.c.b16 %v280, %v278
  %v323 = vpack.c.b16 %v283, %v281
  %v324 = vpack.c.b16 %v284, %v282
  %v325 = vpack.c.b16 %v287, %v285
  %v326 = vpack.c.b16 %v288, %v286
  %v327 = vpack.c.b16 %v291, %v289
  %v328 = vpack.c.b16 %v292, %v290
  %v329 = vpack.c.b16 %v295, %v293
  %v330 = vpack.c.b16 %v296, %v294
  %v331 = vpack.c.b16 %v299, %v297
  %v332 = vpack.c.b16 %v300, %v298
  %365 = vmatprep.subr.bf16.mxu0 %v302
  %366 = vmatpush1.bf16.msra.mxu0 %v301
  %367 = vmatprep.subr.bf16.mxu0 %v304
  %368 = vmatpush1.bf16.msra.mxu0 %v303
  %369 = vmatprep.subr.bf16.mxu0 %v306
  %370 = vmatpush1.bf16.msra.mxu0 %v305
  %371 = vmatprep.subr.bf16.mxu0 %v308
  %372 = vmatpush1.bf16.msra.mxu0 %v307
  %373 = vmatprep.subr.bf16.mxu0 %v310
  %374 = vmatpush1.bf16.msra.mxu0 %v309
  %375 = vmatprep.subr.bf16.mxu0 %v312
  %376 = vmatpush1.bf16.msra.mxu0 %v311
  %377 = vmatprep.subr.bf16.mxu0 %v314
  %378 = vmatpush1.bf16.msra.mxu0 %v313
  %379 = vmatprep.subr.bf16.mxu0 %v316
  %380 = vmatpush1.bf16.msra.mxu0 %v315
  %381 = vmatprep.subr.bf16.mxu0 %v318
  %382 = vmatpush1.bf16.msra.mxu0 %v317
  %383 = vmatprep.subr.bf16.mxu0 %v320
  %384 = vmatpush1.bf16.msra.mxu0 %v319
  %385 = vmatprep.subr.bf16.mxu0 %v322
  %386 = vmatpush1.bf16.msra.mxu0 %v321
  %387 = vmatprep.subr.bf16.mxu0 %v324
  %388 = vmatpush1.bf16.msra.mxu0 %v323
  %389 = vmatprep.subr.bf16.mxu0 %v326
  %390 = vmatpush1.bf16.msra.mxu0 %v325
  %391 = vmatprep.subr.bf16.mxu0 %v328
  %392 = vmatpush1.bf16.msra.mxu0 %v327
  %393 = vmatprep.subr.bf16.mxu0 %v330
  %394 = vmatpush1.bf16.msra.mxu0 %v329
  %395 = vmatprep.subr.bf16.mxu0 %v332
  %396 = vmatpush1.bf16.msra.mxu0 %v331
  %397 = vmatprep.mubr.bf16.mxu0 %v172
  %398 = vmatmul.mubr.bf16.gmra.mrb[0].mxu0 %v171
  %v399 = vpop.f32.mrb[0].mxu0
  %v400 = vadd.f32 0.0, %v399
  %v401 = vpop.f32.mrb[0].mxu0
  %v402 = vadd.f32 0.0, %v401
  %v403 = vpop.f32.mrb[0].mxu0
  %v404 = vadd.f32 0.0, %v403
  %v405 = vpop.f32.mrb[0].mxu0
  %v406 = vadd.f32 0.0, %v405
  %407 = vdwg.mxu0
  %v408 = vpack.c.bf16 %v404, %v400
  %v409 = vpack.c.bf16 %v406, %v402
  %410 = vmatprep.subr.bf16.mxu0 %v409
  %411 = vmatpush1.bf16.msra.mxu0 %v408
  %412 = vmatprep.subr.bf16.mxu0 0
  %413 = vmatpush1.bf16.msra.mxu0 0
  %414 = vmatprep.subr.bf16.mxu0 0
  %415 = vmatpush1.bf16.msra.mxu0 0
  %416 = vmatprep.subr.bf16.mxu0 0
  %417 = vmatpush1.bf16.msra.mxu0 0
  %418 = vmatprep.subr.bf16.mxu0 0
  %419 = vmatpush1.bf16.msra.mxu0 0
  %420 = vmatprep.subr.bf16.mxu0 0
  %421 = vmatpush1.bf16.msra.mxu0 0
  %422 = vmatprep.subr.bf16.mxu0 0
  %423 = vmatpush1.bf16.msra.mxu0 0
  %424 = vmatprep.subr.bf16.mxu0 0
  %425 = vmatpush1.bf16.msra.mxu0 0
  %426 = vmatprep.subr.bf16.mxu0 0
  %427 = vmatpush1.bf16.msra.mxu0 0
  %428 = vmatprep.subr.bf16.mxu0 0
  %429 = vmatpush1.bf16.msra.mxu0 0
  %430 = vmatprep.subr.bf16.mxu0 0
  %431 = vmatpush1.bf16.msra.mxu0 0
  %432 = vmatprep.subr.bf16.mxu0 0
  %433 = vmatpush1.bf16.msra.mxu0 0
  %434 = vmatprep.subr.bf16.mxu0 0
  %435 = vmatpush1.bf16.msra.mxu0 0
  %436 = vmatprep.subr.bf16.mxu0 0
  %437 = vmatpush1.bf16.msra.mxu0 0
  %438 = vmatprep.subr.bf16.mxu0 0
  %439 = vmatpush1.bf16.msra.mxu0 0
  %440 = vmatprep.subr.bf16.mxu0 0
  %441 = vmatpush1.bf16.msra.mxu0 0
  %442 = vmatprep.mubr.bf16.mxu0 0
  %443 = vmatmul.mubr.bf16.gmra.mrb[0].mxu0 %v63
  %v444 = vpop.f32.mrb[0].mxu0
  %v445 = vadd.f32 0.0, %v444
  %v446 = vpop.f32.mrb[0].mxu0
  %v447 = vadd.f32 0.0, %v446
  %v448 = vpop.f32.mrb[0].mxu0
  %v449 = vadd.f32 0.0, %v448
  %v450 = vpop.f32.mrb[0].mxu0
  %v451 = vadd.f32 0.0, %v450
  %452 = vdwg.mxu0
  %v453 = vpack.c.bf16 %v449, %v445
  %v454 = vpack.c.bf16 %v451, %v447
  %v455 = vld [vmem:[%s6] sm:$0xf]
  %v456 = vld [vmem:[%s6 + $0x4] sm:$0xf]
  %v457 = vld [vmem:[%s6 + $0x8] sm:$0xf]
  %v458 = vld [vmem:[%s6 + $0xc] sm:$0xf]
  %v459 = vld [vmem:[%s6 + $0x10] sm:$0xf]
  %v460 = vld [vmem:[%s6 + $0x14] sm:$0xf]
  %v461 = vld [vmem:[%s6 + $0x18] sm:$0xf]
  %v462 = vld [vmem:[%s6 + $0x1c] sm:$0xf]
  %v463 = vld [vmem:[%s6 + $0x20] sm:$0xf]
  %v464 = vld [vmem:[%s6 + $0x24] sm:$0xf]
  %v465 = vld [vmem:[%s6 + $0x28] sm:$0xf]
  %v466 = vld [vmem:[%s6 + $0x2c] sm:$0xf]
  %v467 = vld [vmem:[%s6 + $0x30] sm:$0xf]
  %v468 = vld [vmem:[%s6 + $0x34] sm:$0xf]
  %v469 = vld [vmem:[%s6 + $0x38] sm:$0xf]
  %v470 = vld [vmem:[%s6 + $0x3c] sm:$0xf]
  %v471 = vld [vmem:[%s6 + $0x40] sm:$0xf]
  %v472 = vld [vmem:[%s6 + $0x44] sm:$0xf]
  %v473 = vld [vmem:[%s6 + $0x48] sm:$0xf]
  %v474 = vld [vmem:[%s6 + $0x4c] sm:$0xf]
  %v475 = vld [vmem:[%s6 + $0x50] sm:$0xf]
  %v476 = vld [vmem:[%s6 + $0x54] sm:$0xf]
  %v477 = vld [vmem:[%s6 + $0x58] sm:$0xf]
  %v478 = vld [vmem:[%s6 + $0x5c] sm:$0xf]
  %v479 = vld [vmem:[%s6 + $0x60] sm:$0xf]
  %v480 = vld [vmem:[%s6 + $0x64] sm:$0xf]
  %v481 = vld [vmem:[%s6 + $0x68] sm:$0xf]
  %v482 = vld [vmem:[%s6 + $0x6c] sm:$0xf]
  %v483 = vld [vmem:[%s6 + $0x70] sm:$0xf]
  %v484 = vld [vmem:[%s6 + $0x74] sm:$0xf]
  %v485 = vld [vmem:[%s6 + $0x78] sm:$0xf]
  %v486 = vld [vmem:[%s6 + $0x7c] sm:$0xf]
  %v519 = vunpack.c.l.b16 %v455
  %v520 = vunpack.c.l.b16 %v456
  %v521 = vunpack.c.l.b16 %v457
  %v522 = vunpack.c.l.b16 %v458
  %v523 = vunpack.c.l.b16 %v459
  %v524 = vunpack.c.l.b16 %v460
  %v525 = vunpack.c.l.b16 %v461
  %v526 = vunpack.c.l.b16 %v462
  %v527 = vunpack.c.l.b16 %v463
  %v528 = vunpack.c.l.b16 %v464
  %v529 = vunpack.c.l.b16 %v465
  %v530 = vunpack.c.l.b16 %v466
  %v531 = vunpack.c.l.b16 %v467
  %v532 = vunpack.c.l.b16 %v468
  %v533 = vunpack.c.l.b16 %v469
  %v534 = vunpack.c.l.b16 %v470
  %v535 = vunpack.c.l.b16 %v471
  %v536 = vunpack.c.l.b16 %v472
  %v537 = vunpack.c.l.b16 %v473
  %v538 = vunpack.c.l.b16 %v474
  %v539 = vunpack.c.l.b16 %v475
  %v540 = vunpack.c.l.b16 %v476
  %v541 = vunpack.c.l.b16 %v477
  %v542 = vunpack.c.l.b16 %v478
  %v543 = vunpack.c.l.b16 %v479
  %v544 = vunpack.c.l.b16 %v480
  %v545 = vunpack.c.l.b16 %v481
  %v546 = vunpack.c.l.b16 %v482
  %v547 = vunpack.c.l.b16 %v483
  %v548 = vunpack.c.l.b16 %v484
  %v549 = vunpack.c.l.b16 %v485
  %v550 = vunpack.c.l.b16 %v486
  %v551 = vpack.c.b16 %v520, %v519
  %v552 = vpack.c.b16 %v522, %v521
  %v553 = vpack.c.b16 %v524, %v523
  %v554 = vpack.c.b16 %v526, %v525
  %v555 = vpack.c.b16 %v528, %v527
  %v556 = vpack.c.b16 %v530, %v529
  %v557 = vpack.c.b16 %v532, %v531
  %v558 = vpack.c.b16 %v534, %v533
  %v559 = vpack.c.b16 %v536, %v535
  %v560 = vpack.c.b16 %v538, %v537
  %v561 = vpack.c.b16 %v540, %v539
  %v562 = vpack.c.b16 %v542, %v541
  %v563 = vpack.c.b16 %v544, %v543
  %v564 = vpack.c.b16 %v546, %v545
  %v565 = vpack.c.b16 %v548, %v547
  %v566 = vpack.c.b16 %v550, %v549
  %583 = vmatprep.subr.bf16.mxu0 0
  %584 = vmatpush1.bf16.msra.mxu0 %v551
  %585 = vmatprep.subr.bf16.mxu0 0
  %586 = vmatpush1.bf16.msra.mxu0 %v552
  %587 = vmatprep.subr.bf16.mxu0 0
  %588 = vmatpush1.bf16.msra.mxu0 %v553
  %589 = vmatprep.subr.bf16.mxu0 0
  %590 = vmatpush1.bf16.msra.mxu0 %v554
  %591 = vmatprep.subr.bf16.mxu0 0
  %592 = vmatpush1.bf16.msra.mxu0 %v555
  %593 = vmatprep.subr.bf16.mxu0 0
  %594 = vmatpush1.bf16.msra.mxu0 %v556
  %595 = vmatprep.subr.bf16.mxu0 0
  %596 = vmatpush1.bf16.msra.mxu0 %v557
  %597 = vmatprep.subr.bf16.mxu0 0
  %598 = vmatpush1.bf16.msra.mxu0 %v558
  %599 = vmatprep.subr.bf16.mxu0 0
  %600 = vmatpush1.bf16.msra.mxu0 %v559
  %601 = vmatprep.subr.bf16.mxu0 0
  %602 = vmatpush1.bf16.msra.mxu0 %v560
  %603 = vmatprep.subr.bf16.mxu0 0
  %604 = vmatpush1.bf16.msra.mxu0 %v561
  %605 = vmatprep.subr.bf16.mxu0 0
  %606 = vmatpush1.bf16.msra.mxu0 %v562
  %607 = vmatprep.subr.bf16.mxu0 0
  %608 = vmatpush1.bf16.msra.mxu0 %v563
  %609 = vmatprep.subr.bf16.mxu0 0
  %610 = vmatpush1.bf16.msra.mxu0 %v564
  %611 = vmatprep.subr.bf16.mxu0 0
  %612 = vmatpush1.bf16.msra.mxu0 %v565
  %613 = vmatprep.subr.bf16.mxu0 0
  %614 = vmatpush1.bf16.msra.mxu0 %v566
  %615 = vmatprep.mubr.bf16.mxu0 %v454
  %616 = vmatmul.mubr.bf16.gmra.mrb[0].mxu0 %v453
  %v617 = vpop.f32.mrb[0].mxu0
  %v618 = vadd.f32 0.0, %v617
  %v619 = vpop.f32.mrb[0].mxu0
  %v620 = vpop.f32.mrb[0].mxu0
  %v621 = vadd.f32 0.0, %v620
  %v622 = vpop.f32.mrb[0].mxu0
  %623 = vdwg.mxu0
  %v624 = vld [vmem:[%s11] sm:$0x1]
  %v625 = vlaneseq
  %v626 = vshrl.u32 %v625, 7
  %v627 = vsub.s32 0, %v626
  %v628 = vrot.slane %v624, %v627
  %v629 = vadd.f32 %v618, %v628
  %v630 = vadd.f32 %v621, %v628
  %vm631 = vcmask 123904
  %v632 = vsel %vm631, %v44, 0.0
  %633 = vadd.xlane.f32.xlu0 %v632
  %v634 = vpop.xlane.xlu0 %633
  %v635 = vpack.c.bf16 %v630, %v629
  %v637 = vsel %vm61, %v45, 0
  %639 = vmatprep.subr.bf16.mxu0 0
  %640 = vmatpush1.bf16.msra.mxu0 %v635
  %641 = vmatprep.subr.bf16.mxu0 0
  %642 = vmatpush1.bf16.msra.mxu0 0
  %643 = vmatprep.subr.bf16.mxu0 0
  %644 = vmatpush1.bf16.msra.mxu0 0
  %645 = vmatprep.subr.bf16.mxu0 0
  %646 = vmatpush1.bf16.msra.mxu0 0
  %647 = vmatprep.subr.bf16.mxu0 0
  %648 = vmatpush1.bf16.msra.mxu0 0
  %649 = vmatprep.subr.bf16.mxu0 0
  %650 = vmatpush1.bf16.msra.mxu0 0
  %651 = vmatprep.subr.bf16.mxu0 0
  %652 = vmatpush1.bf16.msra.mxu0 0
  %653 = vmatprep.subr.bf16.mxu0 0
  %654 = vmatpush1.bf16.msra.mxu0 0
  %655 = vmatprep.subr.bf16.mxu0 0
  %656 = vmatpush1.bf16.msra.mxu0 0
  %657 = vmatprep.subr.bf16.mxu0 0
  %658 = vmatpush1.bf16.msra.mxu0 0
  %659 = vmatprep.subr.bf16.mxu0 0
  %660 = vmatpush1.bf16.msra.mxu0 0
  %661 = vmatprep.subr.bf16.mxu0 0
  %662 = vmatpush1.bf16.msra.mxu0 0
  %663 = vmatprep.subr.bf16.mxu0 0
  %664 = vmatpush1.bf16.msra.mxu0 0
  %665 = vmatprep.subr.bf16.mxu0 0
  %666 = vmatpush1.bf16.msra.mxu0 0
  %667 = vmatprep.subr.bf16.mxu0 0
  %668 = vmatpush1.bf16.msra.mxu0 0
  %669 = vmatprep.subr.bf16.mxu0 0
  %670 = vmatpush1.bf16.msra.mxu0 0
  %671 = vmatprep.mubr.bf16.mxu0 0
  %672 = vmatmul.mubr.bf16.gmra.mrb[0].mxu0 %v637
  %v673 = vpop.f32.mrb[0].mxu0
  %v674 = vadd.f32 0.0, %v673
  %v675 = vpop.f32.mrb[0].mxu0
  %v676 = vpop.f32.mrb[0].mxu0
  %v677 = vpop.f32.mrb[0].mxu0
  %678 = vdwg.mxu0
  %v679 = vmax.f32 %v634, 1.0
  %v680 = vrcp.pop %v679
  %v681 = vmul.f32 %v674, %v680
  %vm682 = vcmask 17408
  %v683 = vsel %vm682, %v681, -inf
  %684 = vmax.xlane.f32.xlu0 %v683
  %v685 = vpop.xlane.xlu0 %684
  %v686 = vsub.f32 %v681, %v685
  %v687 = vmul.f32 %v686, 1.442695
  %v688 = vpow.pop %v687
  %v689 = vsel %vm682, %v688, 0.0
  %690 = vadd.xlane.f32.xlu0 %v689
  %v691 = vpop.xlane.xlu0 %690
  %v692 = vlog2.pop %v691
  %v693 = vmul.f32 %v692, 0.6931472
  %v694 = vadd.f32 %v693, %v685
  %v695 = vsub.f32 %v681, %v694
  %v696 = vsub.f32 %v46, 1.0
  %v697 = vsub.f32 %v47, 1.0
  %v698 = vmul.f32 %v696, 1e+30
  %v699 = vmul.f32 %v697, 1e+30
  %701 = vset.pattern.permute.xlu0 0
  %702 = vperm.xlu0 %701, %v698
  %v703 = vpop.permute.xlu0 %702
  %706 = vset.pattern.permute.xlu0 0
  %707 = vperm.xlu0 %706, %v699
  %v708 = vpop.permute.xlu0 %707
  %v710 = vadd.f32 %v618, %v703
  %v711 = vadd.f32 %v621, %v708
  %vm712 = vcmask 56344
  %v713 = vsel %vm712, %v710, -inf
  %v714 = vsel %vm712, %v711, -inf
  %v715 = vmax.f32 %v713, %v714
  %v716 = vrot.slane %v715, 4
  %v717 = vmax.f32 %v715, %v716
  %v718 = vrot.slane %v717, 2
  %v719 = vmax.f32 %v717, %v718
  %v720 = vrot.slane %v719, 1
  %v721 = vmax.f32 %v719, %v720
  %723 = vset.pattern.permute.xlu0 0
  %724 = vperm.xlu0 %723, %v46
  %v725 = vpop.permute.xlu0 %724
  %728 = vset.pattern.permute.xlu0 0
  %729 = vperm.xlu0 %728, %v47
  %v730 = vpop.permute.xlu0 %729
  %v732 = vmul.f32 %v725, %v721
  %v733 = vmul.f32 %v730, %v721
  %v734 = vadd.f32 %v732, 0.0
  %v735 = vadd.f32 %v733, 0.0
  %736 = vset.pattern.permute.xlu0 1
  %737 = vperm.xlu0 %736, %v698
  %v738 = vpop.permute.xlu0 %737
  %740 = vset.pattern.permute.xlu0 1
  %741 = vperm.xlu0 %740, %v699
  %v742 = vpop.permute.xlu0 %741
  %v744 = vadd.f32 %v618, %v738
  %v745 = vadd.f32 %v621, %v742
  %v746 = vsel %vm712, %v744, -inf
  %v747 = vsel %vm712, %v745, -inf
  %v748 = vmax.f32 %v746, %v747
  %v749 = vrot.slane %v748, 4
  %v750 = vmax.f32 %v748, %v749
  %v751 = vrot.slane %v750, 2
  %v752 = vmax.f32 %v750, %v751
  %v753 = vrot.slane %v752, 1
  %v754 = vmax.f32 %v752, %v753
  %755 = vset.pattern.permute.xlu0 1
  %756 = vperm.xlu0 %755, %v46
  %v757 = vpop.permute.xlu0 %756
  %759 = vset.pattern.permute.xlu0 1
  %760 = vperm.xlu0 %759, %v47
  %v761 = vpop.permute.xlu0 %760
  %v763 = vmul.f32 %v757, %v754
  %v764 = vmul.f32 %v761, %v754
  %v765 = vadd.f32 %v734, %v763
  %v766 = vadd.f32 %v735, %v764
  %v767 = vsub.f32 %v618, %v765
  %v768 = vsub.f32 %v621, %v766
  %v769 = vmin.f32 %v767, 0.0
  %v770 = vmin.f32 %v768, 0.0
  %v771 = vmul.f32 %v769, 1.442695
  %v772 = vpow.pop %v771
  %v773 = vmul.f32 %v770, 1.442695
  %v774 = vpow.pop %v773
  %v775 = vpack.c.bf16 %v774, %v772
  %v776 = vld [vmem:[%s7] sm:$0xf]
  %778 = vrot.lane.b32.xlu0 %v775, 125
  %v779 = vpop.permute.xlu0 %778
  %v782 = vunpack.c.l.s4 1983009808
  %v783 = vunpack.c.0.s8 %v782
  %v784 = vlaneseq
  %v785 = vshrl.u32 %v784, 7
  %v786 = vsub.s32 %v783, %v785
  %v787 = vrot.slane %v776, %v786
  %v788 = vcombine.high %v787, %v787
  %vm789 = vcmask 31744
  %v791 = vsel %vm789, %v779, 0
  %vm793 = vcmask 1041408
  %v795 = vsel %vm793, %v787, 0
  %v798 = vsel %vm793, %v788, 0
  %800 = vmatprep.subr.bf16.mxu0 %v798
  %801 = vmatpush1.bf16.msra.mxu0 %v795
  %802 = vmatprep.subr.bf16.mxu0 0
  %803 = vmatpush1.bf16.msra.mxu0 0
  %804 = vmatprep.subr.bf16.mxu0 0
  %805 = vmatpush1.bf16.msra.mxu0 0
  %806 = vmatprep.subr.bf16.mxu0 0
  %807 = vmatpush1.bf16.msra.mxu0 0
  %808 = vmatprep.subr.bf16.mxu0 0
  %809 = vmatpush1.bf16.msra.mxu0 0
  %810 = vmatprep.subr.bf16.mxu0 0
  %811 = vmatpush1.bf16.msra.mxu0 0
  %812 = vmatprep.subr.bf16.mxu0 0
  %813 = vmatpush1.bf16.msra.mxu0 0
  %814 = vmatprep.subr.bf16.mxu0 0
  %815 = vmatpush1.bf16.msra.mxu0 0
  %816 = vmatprep.subr.bf16.mxu0 0
  %817 = vmatpush1.bf16.msra.mxu0 0
  %818 = vmatprep.subr.bf16.mxu0 0
  %819 = vmatpush1.bf16.msra.mxu0 0
  %820 = vmatprep.subr.bf16.mxu0 0
  %821 = vmatpush1.bf16.msra.mxu0 0
  %822 = vmatprep.subr.bf16.mxu0 0
  %823 = vmatpush1.bf16.msra.mxu0 0
  %824 = vmatprep.subr.bf16.mxu0 0
  %825 = vmatpush1.bf16.msra.mxu0 0
  %826 = vmatprep.subr.bf16.mxu0 0
  %827 = vmatpush1.bf16.msra.mxu0 0
  %828 = vmatprep.subr.bf16.mxu0 0
  %829 = vmatpush1.bf16.msra.mxu0 0
  %830 = vmatprep.subr.bf16.mxu0 0
  %831 = vmatpush1.bf16.msra.mxu0 0
  %832 = vmatprep.mubr.bf16.mxu0 0
  %833 = vmatmul.mubr.bf16.gmra.mrb[0].mxu0 %v791
  %v834 = vpop.f32.mrb[0].mxu0
  %v835 = vadd.f32 0.0, %v834
  %v836 = vpop.f32.mrb[0].mxu0
  %v837 = vadd.f32 0.0, %v836
  %v838 = vpop.f32.mrb[0].mxu0
  %v839 = vadd.f32 0.0, %v838
  %v840 = vpop.f32.mrb[0].mxu0
  %v841 = vadd.f32 0.0, %v840
  %842 = vdwg.mxu0
  %v843 = vmul.f32 %v445, %v835
  %v844 = vmul.f32 %v447, %v837
  %v845 = vmul.f32 %v449, %v839
  %v846 = vmul.f32 %v451, %v841
  %v847 = vpack.c.bf16 %v845, %v843
  %v848 = vpack.c.bf16 %v846, %v844
  %849 = vmatprep.subr.bf16.mxu0 %v848
  %850 = vmatpush1.bf16.msra.mxu0 %v847
  %851 = vmatprep.subr.bf16.mxu0 0
  %852 = vmatpush1.bf16.msra.mxu0 0
  %853 = vmatprep.subr.bf16.mxu0 0
  %854 = vmatpush1.bf16.msra.mxu0 0
  %855 = vmatprep.subr.bf16.mxu0 0
  %856 = vmatpush1.bf16.msra.mxu0 0
  %857 = vmatprep.subr.bf16.mxu0 0
  %858 = vmatpush1.bf16.msra.mxu0 0
  %859 = vmatprep.subr.bf16.mxu0 0
  %860 = vmatpush1.bf16.msra.mxu0 0
  %861 = vmatprep.subr.bf16.mxu0 0
  %862 = vmatpush1.bf16.msra.mxu0 0
  %863 = vmatprep.subr.bf16.mxu0 0
  %864 = vmatpush1.bf16.msra.mxu0 0
  %865 = vmatprep.subr.bf16.mxu0 0
  %866 = vmatpush1.bf16.msra.mxu0 0
  %867 = vmatprep.subr.bf16.mxu0 0
  %868 = vmatpush1.bf16.msra.mxu0 0
  %869 = vmatprep.subr.bf16.mxu0 0
  %870 = vmatpush1.bf16.msra.mxu0 0
  %871 = vmatprep.subr.bf16.mxu0 0
  %872 = vmatpush1.bf16.msra.mxu0 0
  %873 = vmatprep.subr.bf16.mxu0 0
  %874 = vmatpush1.bf16.msra.mxu0 0
  %875 = vmatprep.subr.bf16.mxu0 0
  %876 = vmatpush1.bf16.msra.mxu0 0
  %877 = vmatprep.subr.bf16.mxu0 0
  %878 = vmatpush1.bf16.msra.mxu0 0
  %879 = vmatprep.subr.bf16.mxu0 0
  %880 = vmatpush1.bf16.msra.mxu0 0
  %881 = vmatprep.mubr.bf16.mxu0 0
  %882 = vmatmul.mubr.bf16.gmra.mrb[0].mxu0 %v637
  %v883 = vpop.f32.mrb[0].mxu0
  %v884 = vadd.f32 0.0, %v883
  %v885 = vpop.f32.mrb[0].mxu0
  %v886 = vadd.f32 0.0, %v885
  %v887 = vpop.f32.mrb[0].mxu0
  %v888 = vpop.f32.mrb[0].mxu0
  %889 = vdwg.mxu0
  %891 = vmatprep.subr.bf16.mxu0 0
  %892 = vmatpush1.bf16.msra.mxu0 %v779
  %893 = vmatprep.subr.bf16.mxu0 0
  %894 = vmatpush1.bf16.msra.mxu0 0
  %895 = vmatprep.subr.bf16.mxu0 0
  %896 = vmatpush1.bf16.msra.mxu0 0
  %897 = vmatprep.subr.bf16.mxu0 0
  %898 = vmatpush1.bf16.msra.mxu0 0
  %899 = vmatprep.subr.bf16.mxu0 0
  %900 = vmatpush1.bf16.msra.mxu0 0
  %901 = vmatprep.subr.bf16.mxu0 0
  %902 = vmatpush1.bf16.msra.mxu0 0
  %903 = vmatprep.subr.bf16.mxu0 0
  %904 = vmatpush1.bf16.msra.mxu0 0
  %905 = vmatprep.subr.bf16.mxu0 0
  %906 = vmatpush1.bf16.msra.mxu0 0
  %907 = vmatprep.subr.bf16.mxu0 0
  %908 = vmatpush1.bf16.msra.mxu0 0
  %909 = vmatprep.subr.bf16.mxu0 0
  %910 = vmatpush1.bf16.msra.mxu0 0
  %911 = vmatprep.subr.bf16.mxu0 0
  %912 = vmatpush1.bf16.msra.mxu0 0
  %913 = vmatprep.subr.bf16.mxu0 0
  %914 = vmatpush1.bf16.msra.mxu0 0
  %915 = vmatprep.subr.bf16.mxu0 0
  %916 = vmatpush1.bf16.msra.mxu0 0
  %917 = vmatprep.subr.bf16.mxu0 0
  %918 = vmatpush1.bf16.msra.mxu0 0
  %919 = vmatprep.subr.bf16.mxu0 0
  %920 = vmatpush1.bf16.msra.mxu0 0
  %921 = vmatprep.subr.bf16.mxu0 0
  %922 = vmatpush1.bf16.msra.mxu0 0
  %923 = vmatprep.mubr.bf16.mxu0 0
  %924 = vmatmul.mubr.bf16.gmra.mrb[0].mxu0 %v637
  %v925 = vpop.f32.mrb[0].mxu0
  %v926 = vadd.f32 0.0, %v925
  %v927 = vpop.f32.mrb[0].mxu0
  %v928 = vpop.f32.mrb[0].mxu0
  %v929 = vpop.f32.mrb[0].mxu0
  %930 = vdwg.mxu0
  %v931 = vpack.c.bf16 %v926, %v926
  %v933 = vsel %vm789, %v931, 0
  %935 = vmatprep.subr.bf16.mxu0 %v798
  %936 = vmatpush1.bf16.msra.mxu0 %v795
  %937 = vmatprep.subr.bf16.mxu0 0
  %938 = vmatpush1.bf16.msra.mxu0 0
  %939 = vmatprep.subr.bf16.mxu0 0
  %940 = vmatpush1.bf16.msra.mxu0 0
  %941 = vmatprep.subr.bf16.mxu0 0
  %942 = vmatpush1.bf16.msra.mxu0 0
  %943 = vmatprep.subr.bf16.mxu0 0
  %944 = vmatpush1.bf16.msra.mxu0 0
  %945 = vmatprep.subr.bf16.mxu0 0
  %946 = vmatpush1.bf16.msra.mxu0 0
  %947 = vmatprep.subr.bf16.mxu0 0
  %948 = vmatpush1.bf16.msra.mxu0 0
  %949 = vmatprep.subr.bf16.mxu0 0
  %950 = vmatpush1.bf16.msra.mxu0 0
  %951 = vmatprep.subr.bf16.mxu0 0
  %952 = vmatpush1.bf16.msra.mxu0 0
  %953 = vmatprep.subr.bf16.mxu0 0
  %954 = vmatpush1.bf16.msra.mxu0 0
  %955 = vmatprep.subr.bf16.mxu0 0
  %956 = vmatpush1.bf16.msra.mxu0 0
  %957 = vmatprep.subr.bf16.mxu0 0
  %958 = vmatpush1.bf16.msra.mxu0 0
  %959 = vmatprep.subr.bf16.mxu0 0
  %960 = vmatpush1.bf16.msra.mxu0 0
  %961 = vmatprep.subr.bf16.mxu0 0
  %962 = vmatpush1.bf16.msra.mxu0 0
  %963 = vmatprep.subr.bf16.mxu0 0
  %964 = vmatpush1.bf16.msra.mxu0 0
  %965 = vmatprep.subr.bf16.mxu0 0
  %966 = vmatpush1.bf16.msra.mxu0 0
  %967 = vmatprep.mubr.bf16.mxu0 0
  %968 = vmatmul.mubr.bf16.gmra.mrb[0].mxu0 %v933
  %v969 = vpop.f32.mrb[0].mxu0
  %v970 = vadd.f32 0.0, %v969
  %v971 = vpop.f32.mrb[0].mxu0
  %v972 = vadd.f32 0.0, %v971
  %v973 = vpop.f32.mrb[0].mxu0
  %v974 = vpop.f32.mrb[0].mxu0
  %975 = vdwg.mxu0
  %v976 = vmax.f32 %v970, 1e-06
  %v977 = vmax.f32 %v972, 1e-06
  %v978 = vrcp.pop %v976
  %v979 = vrcp.pop %v977
  %v980 = vmul.f32 %v884, %v978
  %v981 = vmul.f32 %v886, %v979
  %v982 = vpack.c.bf16 %v980, %v980
  %v983 = vpack.c.bf16 %v981, %v981
  %v984 = vld [vmem:[%s8] sm:$0xff]
  %v985 = vld [vmem:[%s8 + $0x8] sm:$0xff]
  %v986 = vld [vmem:[%s8 + $0x10] sm:$0xff]
  %v987 = vld [vmem:[%s8 + $0x18] sm:$0xff]
  %v988 = vld [vmem:[%s8 + $0x20] sm:$0xff]
  %v989 = vld [vmem:[%s8 + $0x28] sm:$0xff]
  %v990 = vld [vmem:[%s8 + $0x30] sm:$0xff]
  %v991 = vld [vmem:[%s8 + $0x38] sm:$0xff]
  %v992 = vld [vmem:[%s8 + $0x40] sm:$0xff]
  %v993 = vld [vmem:[%s8 + $0x48] sm:$0xff]
  %v994 = vld [vmem:[%s8 + $0x50] sm:$0xff]
  %v995 = vld [vmem:[%s8 + $0x58] sm:$0xff]
  %v996 = vld [vmem:[%s8 + $0x60] sm:$0xff]
  %v997 = vld [vmem:[%s8 + $0x68] sm:$0xff]
  %v998 = vld [vmem:[%s8 + $0x70] sm:$0xff]
  %v999 = vld [vmem:[%s8 + $0x78] sm:$0xff]
  %v1000 = vld [vmem:[%s8 + $0x80] sm:$0xff]
  %v1001 = vld [vmem:[%s8 + $0x88] sm:$0xff]
  %v1002 = vld [vmem:[%s8 + $0x90] sm:$0xff]
  %v1003 = vld [vmem:[%s8 + $0x98] sm:$0xff]
  %v1004 = vld [vmem:[%s8 + $0xa0] sm:$0xff]
  %v1005 = vld [vmem:[%s8 + $0xa8] sm:$0xff]
  %v1006 = vld [vmem:[%s8 + $0xb0] sm:$0xff]
  %v1007 = vld [vmem:[%s8 + $0xb8] sm:$0xff]
  %v1008 = vld [vmem:[%s8 + $0xc0] sm:$0xff]
  %v1009 = vld [vmem:[%s8 + $0xc8] sm:$0xff]
  %v1010 = vld [vmem:[%s8 + $0xd0] sm:$0xff]
  %v1011 = vld [vmem:[%s8 + $0xd8] sm:$0xff]
  %v1012 = vld [vmem:[%s8 + $0xe0] sm:$0xff]
  %v1013 = vld [vmem:[%s8 + $0xe8] sm:$0xff]
  %v1014 = vld [vmem:[%s8 + $0xf0] sm:$0xff]
  %v1015 = vld [vmem:[%s8 + $0xf8] sm:$0xff]
  %s1016 = scalar_lea.vmem %s11, 1
  %v1017 = vld [vmem:[%s1016] ss:$4 sm:$0x3]
  %v1019 = vlaneseq
  %v1020 = vshrl.u32 %v1019, 7
  %v1021 = vsub.s32 0, %v1020
  %v1022 = vrot.slane %v1017, %v1021
  %v1023 = vlaneseq
  %v1024 = vshrl.u32 %v1023, 7
  %v1025 = vsub.s32 1, %v1024
  %v1026 = vrot.slane %v1017, %v1025
  %v1061 = vunpack.c.l.b16 %v984
  %v1062 = vunpack.c.h.b16 %v984
  %v1063 = vunpack.c.l.b16 %v985
  %v1064 = vunpack.c.h.b16 %v985
  %v1065 = vunpack.c.l.b16 %v986
  %v1066 = vunpack.c.h.b16 %v986
  %v1067 = vunpack.c.l.b16 %v987
  %v1068 = vunpack.c.h.b16 %v987
  %v1069 = vunpack.c.l.b16 %v988
  %v1070 = vunpack.c.h.b16 %v988
  %v1071 = vunpack.c.l.b16 %v989
  %v1072 = vunpack.c.h.b16 %v989
  %v1073 = vunpack.c.l.b16 %v990
  %v1074 = vunpack.c.h.b16 %v990
  %v1075 = vunpack.c.l.b16 %v991
  %v1076 = vunpack.c.h.b16 %v991
  %v1077 = vunpack.c.l.b16 %v992
  %v1078 = vunpack.c.h.b16 %v992
  %v1079 = vunpack.c.l.b16 %v993
  %v1080 = vunpack.c.h.b16 %v993
  %v1081 = vunpack.c.l.b16 %v994
  %v1082 = vunpack.c.h.b16 %v994
  %v1083 = vunpack.c.l.b16 %v995
  %v1084 = vunpack.c.h.b16 %v995
  %v1085 = vunpack.c.l.b16 %v996
  %v1086 = vunpack.c.h.b16 %v996
  %v1087 = vunpack.c.l.b16 %v997
  %v1088 = vunpack.c.h.b16 %v997
  %v1089 = vunpack.c.l.b16 %v998
  %v1090 = vunpack.c.h.b16 %v998
  %v1091 = vunpack.c.l.b16 %v999
  %v1092 = vunpack.c.h.b16 %v999
  %v1093 = vunpack.c.l.b16 %v1000
  %v1094 = vunpack.c.h.b16 %v1000
  %v1095 = vunpack.c.l.b16 %v1001
  %v1096 = vunpack.c.h.b16 %v1001
  %v1097 = vunpack.c.l.b16 %v1002
  %v1098 = vunpack.c.h.b16 %v1002
  %v1099 = vunpack.c.l.b16 %v1003
  %v1100 = vunpack.c.h.b16 %v1003
  %v1101 = vunpack.c.l.b16 %v1004
  %v1102 = vunpack.c.h.b16 %v1004
  %v1103 = vunpack.c.l.b16 %v1005
  %v1104 = vunpack.c.h.b16 %v1005
  %v1105 = vunpack.c.l.b16 %v1006
  %v1106 = vunpack.c.h.b16 %v1006
  %v1107 = vunpack.c.l.b16 %v1007
  %v1108 = vunpack.c.h.b16 %v1007
  %v1109 = vunpack.c.l.b16 %v1008
  %v1110 = vunpack.c.h.b16 %v1008
  %v1111 = vunpack.c.l.b16 %v1009
  %v1112 = vunpack.c.h.b16 %v1009
  %v1113 = vunpack.c.l.b16 %v1010
  %v1114 = vunpack.c.h.b16 %v1010
  %v1115 = vunpack.c.l.b16 %v1011
  %v1116 = vunpack.c.h.b16 %v1011
  %v1117 = vunpack.c.l.b16 %v1012
  %v1118 = vunpack.c.h.b16 %v1012
  %v1119 = vunpack.c.l.b16 %v1013
  %v1120 = vunpack.c.h.b16 %v1013
  %v1121 = vunpack.c.l.b16 %v1014
  %v1122 = vunpack.c.h.b16 %v1014
  %v1123 = vunpack.c.l.b16 %v1015
  %v1124 = vunpack.c.h.b16 %v1015
  %v1125 = vpack.c.b16 %v1063, %v1061
  %v1126 = vpack.c.b16 %v1064, %v1062
  %v1127 = vpack.c.b16 %v1067, %v1065
  %v1128 = vpack.c.b16 %v1068, %v1066
  %v1129 = vpack.c.b16 %v1071, %v1069
  %v1130 = vpack.c.b16 %v1072, %v1070
  %v1131 = vpack.c.b16 %v1075, %v1073
  %v1132 = vpack.c.b16 %v1076, %v1074
  %v1133 = vpack.c.b16 %v1079, %v1077
  %v1134 = vpack.c.b16 %v1080, %v1078
  %v1135 = vpack.c.b16 %v1083, %v1081
  %v1136 = vpack.c.b16 %v1084, %v1082
  %v1137 = vpack.c.b16 %v1087, %v1085
  %v1138 = vpack.c.b16 %v1088, %v1086
  %v1139 = vpack.c.b16 %v1091, %v1089
  %v1140 = vpack.c.b16 %v1092, %v1090
  %v1141 = vpack.c.b16 %v1095, %v1093
  %v1142 = vpack.c.b16 %v1096, %v1094
  %v1143 = vpack.c.b16 %v1099, %v1097
  %v1144 = vpack.c.b16 %v1100, %v1098
  %v1145 = vpack.c.b16 %v1103, %v1101
  %v1146 = vpack.c.b16 %v1104, %v1102
  %v1147 = vpack.c.b16 %v1107, %v1105
  %v1148 = vpack.c.b16 %v1108, %v1106
  %v1149 = vpack.c.b16 %v1111, %v1109
  %v1150 = vpack.c.b16 %v1112, %v1110
  %v1151 = vpack.c.b16 %v1115, %v1113
  %v1152 = vpack.c.b16 %v1116, %v1114
  %v1153 = vpack.c.b16 %v1119, %v1117
  %v1154 = vpack.c.b16 %v1120, %v1118
  %v1155 = vpack.c.b16 %v1123, %v1121
  %v1156 = vpack.c.b16 %v1124, %v1122
  %1189 = vmatprep.subr.bf16.mxu0 %v1126
  %1190 = vmatpush1.bf16.msra.mxu0 %v1125
  %1191 = vmatprep.subr.bf16.mxu0 %v1128
  %1192 = vmatpush1.bf16.msra.mxu0 %v1127
  %1193 = vmatprep.subr.bf16.mxu0 %v1130
  %1194 = vmatpush1.bf16.msra.mxu0 %v1129
  %1195 = vmatprep.subr.bf16.mxu0 %v1132
  %1196 = vmatpush1.bf16.msra.mxu0 %v1131
  %1197 = vmatprep.subr.bf16.mxu0 %v1134
  %1198 = vmatpush1.bf16.msra.mxu0 %v1133
  %1199 = vmatprep.subr.bf16.mxu0 %v1136
  %1200 = vmatpush1.bf16.msra.mxu0 %v1135
  %1201 = vmatprep.subr.bf16.mxu0 %v1138
  %1202 = vmatpush1.bf16.msra.mxu0 %v1137
  %1203 = vmatprep.subr.bf16.mxu0 %v1140
  %1204 = vmatpush1.bf16.msra.mxu0 %v1139
  %1205 = vmatprep.subr.bf16.mxu0 %v1142
  %1206 = vmatpush1.bf16.msra.mxu0 %v1141
  %1207 = vmatprep.subr.bf16.mxu0 %v1144
  %1208 = vmatpush1.bf16.msra.mxu0 %v1143
  %1209 = vmatprep.subr.bf16.mxu0 %v1146
  %1210 = vmatpush1.bf16.msra.mxu0 %v1145
  %1211 = vmatprep.subr.bf16.mxu0 %v1148
  %1212 = vmatpush1.bf16.msra.mxu0 %v1147
  %1213 = vmatprep.subr.bf16.mxu0 %v1150
  %1214 = vmatpush1.bf16.msra.mxu0 %v1149
  %1215 = vmatprep.subr.bf16.mxu0 %v1152
  %1216 = vmatpush1.bf16.msra.mxu0 %v1151
  %1217 = vmatprep.subr.bf16.mxu0 %v1154
  %1218 = vmatpush1.bf16.msra.mxu0 %v1153
  %1219 = vmatprep.subr.bf16.mxu0 %v1156
  %1220 = vmatpush1.bf16.msra.mxu0 %v1155
  %1221 = vmatprep.mubr.bf16.mxu0 %v983
  %1222 = vmatmul.mubr.bf16.gmra.mrb[0].mxu0 %v982
  %v1223 = vpop.f32.mrb[0].mxu0
  %v1224 = vadd.f32 %v1022, %v1223
  %v1225 = vpop.f32.mrb[0].mxu0
  %v1226 = vadd.f32 %v1026, %v1225
  %v1227 = vpop.f32.mrb[0].mxu0
  %v1228 = vpop.f32.mrb[0].mxu0
  %1229 = vdwg.mxu0
  %v1230 = vmax.f32 %v1224, 0.0
  %v1231 = vmax.f32 %v1226, 0.0
  %v1232 = vpack.c.bf16 %v1230, %v1230
  %v1233 = vpack.c.bf16 %v1231, %v1231
  %v1234 = vld [vmem:[%s9] sm:$0xf]
  %v1235 = vld [vmem:[%s9 + $0x4] sm:$0xf]
  %v1236 = vld [vmem:[%s9 + $0x8] sm:$0xf]
  %v1237 = vld [vmem:[%s9 + $0xc] sm:$0xf]
  %v1238 = vld [vmem:[%s9 + $0x10] sm:$0xf]
  %v1239 = vld [vmem:[%s9 + $0x14] sm:$0xf]
  %v1240 = vld [vmem:[%s9 + $0x18] sm:$0xf]
  %v1241 = vld [vmem:[%s9 + $0x1c] sm:$0xf]
  %v1242 = vld [vmem:[%s9 + $0x20] sm:$0xf]
  %v1243 = vld [vmem:[%s9 + $0x24] sm:$0xf]
  %v1244 = vld [vmem:[%s9 + $0x28] sm:$0xf]
  %v1245 = vld [vmem:[%s9 + $0x2c] sm:$0xf]
  %v1246 = vld [vmem:[%s9 + $0x30] sm:$0xf]
  %v1247 = vld [vmem:[%s9 + $0x34] sm:$0xf]
  %v1248 = vld [vmem:[%s9 + $0x38] sm:$0xf]
  %v1249 = vld [vmem:[%s9 + $0x3c] sm:$0xf]
  %v1250 = vld [vmem:[%s9 + $0x40] sm:$0xf]
  %v1251 = vld [vmem:[%s9 + $0x44] sm:$0xf]
  %v1252 = vld [vmem:[%s9 + $0x48] sm:$0xf]
  %v1253 = vld [vmem:[%s9 + $0x4c] sm:$0xf]
  %v1254 = vld [vmem:[%s9 + $0x50] sm:$0xf]
  %v1255 = vld [vmem:[%s9 + $0x54] sm:$0xf]
  %v1256 = vld [vmem:[%s9 + $0x58] sm:$0xf]
  %v1257 = vld [vmem:[%s9 + $0x5c] sm:$0xf]
  %v1258 = vld [vmem:[%s9 + $0x60] sm:$0xf]
  %v1259 = vld [vmem:[%s9 + $0x64] sm:$0xf]
  %v1260 = vld [vmem:[%s9 + $0x68] sm:$0xf]
  %v1261 = vld [vmem:[%s9 + $0x6c] sm:$0xf]
  %v1262 = vld [vmem:[%s9 + $0x70] sm:$0xf]
  %v1263 = vld [vmem:[%s9 + $0x74] sm:$0xf]
  %v1264 = vld [vmem:[%s9 + $0x78] sm:$0xf]
  %v1265 = vld [vmem:[%s9 + $0x7c] sm:$0xf]
  %v1266 = vld [vmem:[%s11 + $0x2] sm:$0x1]
  %v1267 = vlaneseq
  %v1268 = vshrl.u32 %v1267, 7
  %v1269 = vsub.s32 0, %v1268
  %v1270 = vrot.slane %v1266, %v1269
  %v1303 = vunpack.c.l.b16 %v1234
  %v1304 = vunpack.c.l.b16 %v1235
  %v1305 = vunpack.c.l.b16 %v1236
  %v1306 = vunpack.c.l.b16 %v1237
  %v1307 = vunpack.c.l.b16 %v1238
  %v1308 = vunpack.c.l.b16 %v1239
  %v1309 = vunpack.c.l.b16 %v1240
  %v1310 = vunpack.c.l.b16 %v1241
  %v1311 = vunpack.c.l.b16 %v1242
  %v1312 = vunpack.c.l.b16 %v1243
  %v1313 = vunpack.c.l.b16 %v1244
  %v1314 = vunpack.c.l.b16 %v1245
  %v1315 = vunpack.c.l.b16 %v1246
  %v1316 = vunpack.c.l.b16 %v1247
  %v1317 = vunpack.c.l.b16 %v1248
  %v1318 = vunpack.c.l.b16 %v1249
  %v1319 = vunpack.c.l.b16 %v1250
  %v1320 = vunpack.c.l.b16 %v1251
  %v1321 = vunpack.c.l.b16 %v1252
  %v1322 = vunpack.c.l.b16 %v1253
  %v1323 = vunpack.c.l.b16 %v1254
  %v1324 = vunpack.c.l.b16 %v1255
  %v1325 = vunpack.c.l.b16 %v1256
  %v1326 = vunpack.c.l.b16 %v1257
  %v1327 = vunpack.c.l.b16 %v1258
  %v1328 = vunpack.c.l.b16 %v1259
  %v1329 = vunpack.c.l.b16 %v1260
  %v1330 = vunpack.c.l.b16 %v1261
  %v1331 = vunpack.c.l.b16 %v1262
  %v1332 = vunpack.c.l.b16 %v1263
  %v1333 = vunpack.c.l.b16 %v1264
  %v1334 = vunpack.c.l.b16 %v1265
  %v1335 = vpack.c.b16 %v1304, %v1303
  %v1336 = vpack.c.b16 %v1306, %v1305
  %v1337 = vpack.c.b16 %v1308, %v1307
  %v1338 = vpack.c.b16 %v1310, %v1309
  %v1339 = vpack.c.b16 %v1312, %v1311
  %v1340 = vpack.c.b16 %v1314, %v1313
  %v1341 = vpack.c.b16 %v1316, %v1315
  %v1342 = vpack.c.b16 %v1318, %v1317
  %v1343 = vpack.c.b16 %v1320, %v1319
  %v1344 = vpack.c.b16 %v1322, %v1321
  %v1345 = vpack.c.b16 %v1324, %v1323
  %v1346 = vpack.c.b16 %v1326, %v1325
  %v1347 = vpack.c.b16 %v1328, %v1327
  %v1348 = vpack.c.b16 %v1330, %v1329
  %v1349 = vpack.c.b16 %v1332, %v1331
  %v1350 = vpack.c.b16 %v1334, %v1333
  %1367 = vmatprep.subr.bf16.mxu0 0
  %1368 = vmatpush1.bf16.msra.mxu0 %v1335
  %1369 = vmatprep.subr.bf16.mxu0 0
  %1370 = vmatpush1.bf16.msra.mxu0 %v1336
  %1371 = vmatprep.subr.bf16.mxu0 0
  %1372 = vmatpush1.bf16.msra.mxu0 %v1337
  %1373 = vmatprep.subr.bf16.mxu0 0
  %1374 = vmatpush1.bf16.msra.mxu0 %v1338
  %1375 = vmatprep.subr.bf16.mxu0 0
  %1376 = vmatpush1.bf16.msra.mxu0 %v1339
  %1377 = vmatprep.subr.bf16.mxu0 0
  %1378 = vmatpush1.bf16.msra.mxu0 %v1340
  %1379 = vmatprep.subr.bf16.mxu0 0
  %1380 = vmatpush1.bf16.msra.mxu0 %v1341
  %1381 = vmatprep.subr.bf16.mxu0 0
  %1382 = vmatpush1.bf16.msra.mxu0 %v1342
  %1383 = vmatprep.subr.bf16.mxu0 0
  %1384 = vmatpush1.bf16.msra.mxu0 %v1343
  %1385 = vmatprep.subr.bf16.mxu0 0
  %1386 = vmatpush1.bf16.msra.mxu0 %v1344
  %1387 = vmatprep.subr.bf16.mxu0 0
  %1388 = vmatpush1.bf16.msra.mxu0 %v1345
  %1389 = vmatprep.subr.bf16.mxu0 0
  %1390 = vmatpush1.bf16.msra.mxu0 %v1346
  %1391 = vmatprep.subr.bf16.mxu0 0
  %1392 = vmatpush1.bf16.msra.mxu0 %v1347
  %1393 = vmatprep.subr.bf16.mxu0 0
  %1394 = vmatpush1.bf16.msra.mxu0 %v1348
  %1395 = vmatprep.subr.bf16.mxu0 0
  %1396 = vmatpush1.bf16.msra.mxu0 %v1349
  %1397 = vmatprep.subr.bf16.mxu0 0
  %1398 = vmatpush1.bf16.msra.mxu0 %v1350
  %1399 = vmatprep.mubr.bf16.mxu0 %v1233
  %1400 = vmatmul.mubr.bf16.gmra.mrb[0].mxu0 %v1232
  %v1401 = vpop.f32.mrb[0].mxu0
  %v1402 = vadd.f32 %v1270, %v1401
  %v1403 = vpop.f32.mrb[0].mxu0
  %v1404 = vpop.f32.mrb[0].mxu0
  %v1405 = vpop.f32.mrb[0].mxu0
  %1406 = vdwg.mxu0
  %v1407 = vmax.f32 %v1402, 0.0
  %v1408 = vpack.c.bf16 %v1407, %v1407
  %v1409 = vld [vmem:[%s10] sm:$0xf]
  %v1410 = vld [vmem:[%s10 + $0x4] sm:$0xf]
  %v1411 = vld [vmem:[%s10 + $0x8] sm:$0xf]
  %v1412 = vld [vmem:[%s10 + $0xc] sm:$0xf]
  %v1413 = vld [vmem:[%s10 + $0x10] sm:$0xf]
  %v1414 = vld [vmem:[%s10 + $0x14] sm:$0xf]
  %v1415 = vld [vmem:[%s10 + $0x18] sm:$0xf]
  %v1416 = vld [vmem:[%s10 + $0x1c] sm:$0xf]
  %v1417 = vld [vmem:[%s10 + $0x20] sm:$0xf]
  %v1418 = vld [vmem:[%s10 + $0x24] sm:$0xf]
  %v1419 = vld [vmem:[%s10 + $0x28] sm:$0xf]
  %v1420 = vld [vmem:[%s10 + $0x2c] sm:$0xf]
  %v1421 = vld [vmem:[%s10 + $0x30] sm:$0xf]
  %v1422 = vld [vmem:[%s10 + $0x34] sm:$0xf]
  %v1423 = vld [vmem:[%s10 + $0x38] sm:$0xf]
  %v1424 = vld [vmem:[%s10 + $0x3c] sm:$0xf]
  %v1425 = vld [vmem:[%s11 + $0x3] sm:$0x1]
  %v1426 = vlaneseq
  %v1427 = vshrl.u32 %v1426, 7
  %v1428 = vsub.s32 0, %v1427
  %v1429 = vrot.slane %v1425, %v1428
  %v1446 = vunpack.c.l.b16 %v1409
  %v1447 = vunpack.c.l.b16 %v1410
  %v1448 = vunpack.c.l.b16 %v1411
  %v1449 = vunpack.c.l.b16 %v1412
  %v1450 = vunpack.c.l.b16 %v1413
  %v1451 = vunpack.c.l.b16 %v1414
  %v1452 = vunpack.c.l.b16 %v1415
  %v1453 = vunpack.c.l.b16 %v1416
  %v1454 = vunpack.c.l.b16 %v1417
  %v1455 = vunpack.c.l.b16 %v1418
  %v1456 = vunpack.c.l.b16 %v1419
  %v1457 = vunpack.c.l.b16 %v1420
  %v1458 = vunpack.c.l.b16 %v1421
  %v1459 = vunpack.c.l.b16 %v1422
  %v1460 = vunpack.c.l.b16 %v1423
  %v1461 = vunpack.c.l.b16 %v1424
  %v1462 = vpack.c.b16 %v1447, %v1446
  %v1463 = vpack.c.b16 %v1449, %v1448
  %v1464 = vpack.c.b16 %v1451, %v1450
  %v1465 = vpack.c.b16 %v1453, %v1452
  %v1466 = vpack.c.b16 %v1455, %v1454
  %v1467 = vpack.c.b16 %v1457, %v1456
  %v1468 = vpack.c.b16 %v1459, %v1458
  %v1469 = vpack.c.b16 %v1461, %v1460
  %1478 = vmatprep.subr.bf16.mxu0 0
  %1479 = vmatpush1.bf16.msra.mxu0 %v1462
  %1480 = vmatprep.subr.bf16.mxu0 0
  %1481 = vmatpush1.bf16.msra.mxu0 %v1463
  %1482 = vmatprep.subr.bf16.mxu0 0
  %1483 = vmatpush1.bf16.msra.mxu0 %v1464
  %1484 = vmatprep.subr.bf16.mxu0 0
  %1485 = vmatpush1.bf16.msra.mxu0 %v1465
  %1486 = vmatprep.subr.bf16.mxu0 0
  %1487 = vmatpush1.bf16.msra.mxu0 %v1466
  %1488 = vmatprep.subr.bf16.mxu0 0
  %1489 = vmatpush1.bf16.msra.mxu0 %v1467
  %1490 = vmatprep.subr.bf16.mxu0 0
  %1491 = vmatpush1.bf16.msra.mxu0 %v1468
  %1492 = vmatprep.subr.bf16.mxu0 0
  %1493 = vmatpush1.bf16.msra.mxu0 %v1469
  %1494 = vmatprep.subr.bf16.mxu0 0
  %1495 = vmatpush1.bf16.msra.mxu0 0
  %1496 = vmatprep.subr.bf16.mxu0 0
  %1497 = vmatpush1.bf16.msra.mxu0 0
  %1498 = vmatprep.subr.bf16.mxu0 0
  %1499 = vmatpush1.bf16.msra.mxu0 0
  %1500 = vmatprep.subr.bf16.mxu0 0
  %1501 = vmatpush1.bf16.msra.mxu0 0
  %1502 = vmatprep.subr.bf16.mxu0 0
  %1503 = vmatpush1.bf16.msra.mxu0 0
  %1504 = vmatprep.subr.bf16.mxu0 0
  %1505 = vmatpush1.bf16.msra.mxu0 0
  %1506 = vmatprep.subr.bf16.mxu0 0
  %1507 = vmatpush1.bf16.msra.mxu0 0
  %1508 = vmatprep.subr.bf16.mxu0 0
  %1509 = vmatpush1.bf16.msra.mxu0 0
  %1510 = vmatprep.mubr.bf16.mxu0 0
  %1511 = vmatmul.mubr.bf16.gmra.mrb[0].mxu0 %v1408
  %v1512 = vpop.f32.mrb[0].mxu0
  %v1513 = vadd.f32 %v1429, %v1512
  %v1514 = vpop.f32.mrb[0].mxu0
  %v1515 = vpop.f32.mrb[0].mxu0
  %v1516 = vpop.f32.mrb[0].mxu0
  %1517 = vdwg.mxu0
  %v1518 = vsel %vm682, %v1513, -inf
  %1519 = vmax.xlane.f32.xlu0 %v1518
  %v1520 = vpop.xlane.xlu0 %1519
  %v1521 = vsub.f32 %v1513, %v1520
  %v1522 = vmul.f32 %v1521, 1.442695
  %v1523 = vpow.pop %v1522
  %v1524 = vsel %vm682, %v1523, 0.0
  %1525 = vadd.xlane.f32.xlu0 %v1524
  %v1526 = vpop.xlane.xlu0 %1525
  %v1527 = vlog2.pop %v1526
  %v1528 = vmul.f32 %v1527, 0.6931472
  %v1529 = vadd.f32 %v1528, %v1520
  %v1530 = vsub.f32 %v1513, %v1529
  %1532 = vrot.lane.b32.xlu0 %v1530, 3
  %v1533 = vpop.permute.xlu0 %1532
  %vm1535 = vcmask 23552
  %v1536 = vsel %vm1535, %v695, %v1533
  %vm1537 = vcmask 41984
  %1538 = vst.msk [vmem:[%s12] sm:$0x3] %vm1537, %v1536
  // Predicated region
  $region50: #{mccd_forward.1} parent=0 // pred_check
    _
  $region51: #{mccd_forward.1} parent=0 // pred_check_branch
    %1540 = sbr.rel (0) target = $region53
  $region52: #{mccd_forward.1} parent=0 // pred_region
    _
  $region53: #{mccd_forward.1} parent=0 // pred_fallthru
    _
  // Predicated region
  $region54: #{mccd_forward.1} parent=0 // pred_check
    _
  $region55: #{mccd_forward.1} parent=0 // pred_check_branch
    %1542 = sbr.rel (0) target = $region57
  $region56: #{mccd_forward.1} parent=0 // pred_region
    _
  $region57: #{mccd_forward.1} parent=0 // pred_fallthru
    _

</llo_original>
